<compile_context>
chip_gen: v7x
topology: tpu7x:2x2x1
jax: 0.10.0
libtpu: 0.0.40
codegen_flags: <defaults>
</compile_context>

<pallas_src>
import math
from functools import partial

import jax
import jax.numpy as jnp
from jax.experimental import pallas as pl
from jax.experimental.pallas import tpu as pltpu

EPS = 1e-5        # PyTorch BatchNorm default eps
LANE = 128        # TPU lane width; feature dims are zero-padded to this


def _round_up(x, m):
    return (x + m - 1) // m * m


# ----------------------------- Pallas kernel -------------------------------

def fused_multitask_kernel(x_ref, wc_ref, bc_ref, wmx_ref, wav_ref, bn_ref,
                           wh_ref, bh_ref, o_ref, im_ref, *, C, H, W, BBLK):
    """Backbone conv(+BN2d folded)+ReLU, concat-pool, neck(+BN1d folded)+ReLU
    and ALL task heads for one batch block (grid axis = batch blocks).

      x_ref:   (BBLK, C, HW)        f32 raw input (HW = H*W, lane-dense)
      wc_ref:  (F_pad, KC_pad)      bf16 BN-folded conv weight, col k*C+c is
                                    tap (kh=k//3, kw=k%3), channel c
      bc_ref:  (F_pad, 1)           f32 folded conv bias
      wmx/wav: (NK_pad, F_pad)      bf16 max-/avg-half of the BN-folded neck
                                    weight, transposed (column orientation)
      bn_ref:  (NK_pad, 1)          f32 folded neck bias
      wh_ref:  (NC_pad, NK_pad)     bf16 all heads' BN-folded weights (transposed)
      bh_ref:  (NC_pad, 1)          f32 concatenated folded head bias
      o_ref:   (1, NC_pad, BBLK)    f32 logits (one column per image)
      im_ref:  (KC_pad, BBLK*HW)    f32 VMEM scratch: im2col of the 3x3 conv
    """
    HW = H * W

    # Horizontal-edge masks built in-kernel (no mask input / DMA).  A left tap
    # (dw==0) must never read a source column W-1 (that would be the previous
    # row's edge after flattening); a right tap (dw==2) must never read col 0.
    col = jax.lax.broadcasted_iota(jnp.int32, (1, HW), 1) % W
    keep_l = (col != (W - 1)).astype(jnp.float32)
    keep_r = (col != 0).astype(jnp.float32)

    # Pre-zero the scratch every grid step: the un-stored lane/row ranges ARE
    # the conv's zero padding (top/bottom rows + KC_pad tail).  Per-step (not
    # program_id==0-gated) because the grid axis is "parallel" across cores.
    im_ref[...] = jnp.zeros_like(im_ref)

    # ---- in-kernel im2col: 9 shifted lane slices per image ----
    for b in range(BBLK):                       # unrolled, BBLK is small
        xb = x_ref[b]                           # (C, HW) f32
        xb_tap = (xb * keep_l, xb, xb * keep_r)   # indexed by dw
        for dh in range(3):
            for dw in range(3):
                k = dh * 3 + dw
                off = (dh - 1) * W + (dw - 1)   # flat source shift of this tap
                p_lo = max(0, -off)             # first valid destination column
                s_lo = max(0, off)              # matching source column
                ln = HW - abs(off)
                piece = xb_tap[dw][:, s_lo:s_lo + ln]
                im_ref[k * C:(k + 1) * C,
                       b * HW + p_lo:b * HW + p_lo + ln] = piece

    # ---- ONE K=9C MXU matmul for the whole block + folded BN2d + ReLU ----
    im = im_ref[...].astype(wc_ref.dtype)                       # bf16 for MXU
    y = jnp.dot(wc_ref[...], im, preferred_element_type=jnp.float32)
    y = jnp.maximum(y + bc_ref[...], 0.0)                       # (F_pad, BBLK*HW) f32

    # ---- pooling + neck + all heads (column orientation, per image) ----
    # Every column of y is a real conv output (padding handled above), so the
    # reductions need no mask and max >= 0 holds trivially after the ReLU.
    inv_hw = 1.0 / (H * W)
    for b in range(BBLK):
        seg = y[:, b * HW:(b + 1) * HW]
        mx = jnp.max(seg, axis=1, keepdims=True)                # AdaptiveMaxPool2d(1)
        av = jnp.sum(seg, axis=1, keepdims=True) * inv_hw       # AdaptiveAvgPool2d(1)
        # neck: BN1d(2F) folded into Linear; split max/avg halves -> no concat.
        h = (jnp.dot(wmx_ref[...], mx.astype(wmx_ref.dtype),
                     preferred_element_type=jnp.float32)
             + jnp.dot(wav_ref[...], av.astype(wav_ref.dtype),
                       preferred_element_type=jnp.float32)
             + bn_ref[...])
        h = jnp.maximum(h, 0.0)                                 # model._activ (ReLU)
        logit = (jnp.dot(wh_ref[...], h.astype(wh_ref.dtype),
                         preferred_element_type=jnp.float32)
                 + bh_ref[...])                                 # (NC_pad, 1) f32
        o_ref[0, :, b:b + 1] = logit


# ----------------------------- wrapper --------------------------------------

def _pick_batch_block(n, cap=8):
    """Largest divisor of n that still leaves >=2 grid steps (keeps both v7x
    TensorCores busy) and is small enough to bound the im2col scratch."""
    best = 1
    for d in range(1, min(cap, max(1, n // 2)) + 1):
        if n % d == 0:
            best = d
    return best


def multi_task_forward(x_nchw, fp, out_c):
    """backbone -> neck -> ReLU -> tuple(head_i(x)), eval-mode semantics."""
    n, c, h, w = x_nchw.shape
    hw = h * w
    f_pad, kc_pad = fp["w_conv"].shape
    nk_pad = fp["w_mx_t"].shape[0]
    nc_pad = fp["w_heads_t"].shape[0]

    bblk = _pick_batch_block(n)
    nblk = n // bblk

    # Free metadata-only reshape; the Pallas kernel is the only reader of x
    # (padding, bf16 cast and im2col all happen in-kernel).
    x_flat = x_nchw.reshape(n, c, hw)

    res = lambda i: (0, 0)          # resident (weight) blocks

    out = pl.pallas_call(
        partial(fused_multitask_kernel, C=c, H=h, W=w, BBLK=bblk),
        out_shape=jax.ShapeDtypeStruct((nblk, nc_pad, bblk), jnp.float32),
        grid=(nblk,),
        in_specs=[
            pl.BlockSpec((bblk, c, hw), lambda i: (i, 0, 0)),
            pl.BlockSpec((f_pad, kc_pad), res),
            pl.BlockSpec((f_pad, 1), res),
            pl.BlockSpec((nk_pad, f_pad), res),
            pl.BlockSpec((nk_pad, f_pad), res),
            pl.BlockSpec((nk_pad, 1), res),
            pl.BlockSpec((nc_pad, nk_pad), res),
            pl.BlockSpec((nc_pad, 1), res),
        ],
        out_specs=pl.BlockSpec((1, nc_pad, bblk), lambda i: (i, 0, 0)),
        scratch_shapes=[pltpu.VMEM((kc_pad, bblk * hw), jnp.float32)],
        compiler_params=pltpu.CompilerParams(
            dimension_semantics=("parallel",),      # shard batch over v7x's 2 TCs
            vmem_limit_bytes=32 * 1024 * 1024),
    )(x_flat, fp["w_conv"], fp["b_conv"], fp["w_mx_t"], fp["w_av_t"],
      fp["b_neck"], fp["w_heads_t"], fp["b_heads"])

    # (nblk, NC_pad, bblk) -> (N, NC_pad): tiny layout plumbing on a (N,128) slab.
    logits = jnp.transpose(out, (0, 2, 1)).reshape(n, nc_pad)
    outs, off = [], 0
    for ncls in out_c:
        outs.append(logits[:, off:off + ncls])
        off += ncls
    return tuple(outs)


# ----------------------------- parameters -----------------------------------

def _bn_params(nf):
    return (jnp.ones((1, nf), jnp.float32),   # gamma
            jnp.zeros((1, nf), jnp.float32),  # beta
            jnp.zeros((1, nf), jnp.float32),  # running_mean
            jnp.ones((1, nf), jnp.float32))   # running_var


def _kaiming_linear(key, in_f, out_f):
    """nn.init.kaiming_normal_ on (out, in) weight; bias zero."""
    std = math.sqrt(2.0 / in_f)
    wt = std * jax.random.normal(key, (out_f, in_f), jnp.float32)
    return jnp.transpose(wt), jnp.zeros((1, out_f), jnp.float32)   # (in, out)


def make_params(key, c_in=4, backbone_f=8, neck_nf=32, out_c=(3, 5)):
    """Original (unfolded) parameterization of the module."""
    keys = jax.random.split(key, 3 + len(out_c))
    # synthetic backbone conv (stands in for pretrained arch weights)
    conv_w = 0.1 * jax.random.normal(keys[0], (9 * c_in, backbone_f), jnp.float32)
    conv_b = jnp.zeros((1, backbone_f), jnp.float32)
    bb_g, bb_b, bb_m, bb_v = _bn_params(backbone_f)

    nf2 = 2 * backbone_f                      # AdaptiveConcatPool2d doubles F
    n_g, n_b, n_m, n_v = _bn_params(nf2)
    neck_w, neck_b = _kaiming_linear(keys[1], nf2, neck_nf)

    heads = []
    for i, nc in enumerate(out_c):
        g1, b1, m1, v1 = _bn_params(neck_nf)
        hw_, hb = _kaiming_linear(keys[3 + i], neck_nf, nc)
        g2, b2, m2, v2 = _bn_params(nc)
        heads.append(dict(bn1_g=g1, bn1_b=b1, bn1_m=m1, bn1_v=v1,
                          w=hw_, b=hb,
                          bn2_g=g2, bn2_b=b2, bn2_m=m2, bn2_v=v2))

    return dict(conv_w=conv_w, conv_b=conv_b,
                bb_bn_g=bb_g, bb_bn_b=bb_b, bb_bn_m=bb_m, bb_bn_v=bb_v,
                neck_bn_g=n_g, neck_bn_b=n_b, neck_bn_m=n_m, neck_bn_v=n_v,
                neck_w=neck_w, neck_b=neck_b,
                heads=heads)


def fold_params(params):
    """One-time prep: fold every BatchNorm into the adjacent Linear/conv,
    concatenate all head weights, transpose the neck/head weights for the
    column-oriented in-kernel epilogue, zero-pad feature dims to 128 lanes and
    cast matmul operands to bf16."""
    c9, f = params["conv_w"].shape
    nf2, neck_nf = params["neck_w"].shape
    out_c = tuple(hp["w"].shape[1] for hp in params["heads"])
    f_pad = _round_up(f, LANE)
    kc_pad = _round_up(c9, 8)
    nk_pad = _round_up(neck_nf, LANE)
    nc_pad = _round_up(sum(out_c), LANE)

    # backbone conv + BN2d
    s = params["bb_bn_g"] * jax.lax.rsqrt(params["bb_bn_v"] + EPS)        # (1, F)
    wc = params["conv_w"] * s                                             # (9C, F)
    bc = (params["conv_b"] - params["bb_bn_m"]) * s + params["bb_bn_b"]   # (1, F)
    w_conv = jnp.zeros((f_pad, kc_pad), jnp.float32).at[:f, :c9].set(wc.T)
    b_conv = jnp.zeros((f_pad, 1), jnp.float32).at[:f, 0].set(bc[0])

    # neck BN1d(2F) folded into Linear(2F, neck_nf); split [max | avg] halves,
    # transposed for column-oriented epilogue.
    s_n = params["neck_bn_g"] * jax.lax.rsqrt(params["neck_bn_v"] + EPS)  # (1, 2F)
    t_n = params["neck_bn_b"] - params["neck_bn_m"] * s_n
    wn = params["neck_w"] * s_n.T                                         # (2F, NK)
    bn = t_n @ params["neck_w"] + params["neck_b"]                        # (1, NK)
    w_mx_t = jnp.zeros((nk_pad, f_pad), jnp.float32).at[:neck_nf, :f].set(wn[:f].T)
    w_av_t = jnp.zeros((nk_pad, f_pad), jnp.float32).at[:neck_nf, :f].set(wn[f:].T)
    b_neck = jnp.zeros((nk_pad, 1), jnp.float32).at[:neck_nf, 0].set(bn[0])

    # heads: BN1d(nf) -> Linear(nf, nc) -> BN1d(nc), folded + concatenated + transposed
    w_heads_t = jnp.zeros((nc_pad, nk_pad), jnp.float32)
    b_heads = jnp.zeros((nc_pad, 1), jnp.float32)
    off = 0
    for hp, nc in zip(params["heads"], out_c):
        s1 = hp["bn1_g"] * jax.lax.rsqrt(hp["bn1_v"] + EPS)
        t1 = hp["bn1_b"] - hp["bn1_m"] * s1
        w1 = hp["w"] * s1.T                    # (NK, nc)
        b1 = t1 @ hp["w"] + hp["b"]            # (1, nc)
        s2 = hp["bn2_g"] * jax.lax.rsqrt(hp["bn2_v"] + EPS)
        t2 = hp["bn2_b"] - hp["bn2_m"] * s2
        w2 = w1 * s2
        b2 = b1 * s2 + t2
        w_heads_t = w_heads_t.at[off:off + nc, :neck_nf].set(w2.T)
        b_heads = b_heads.at[off:off + nc, 0].set(b2[0])
        off += nc

    return dict(w_conv=w_conv.astype(jnp.bfloat16), b_conv=b_conv,
                w_mx_t=w_mx_t.astype(jnp.bfloat16),
                w_av_t=w_av_t.astype(jnp.bfloat16),
                b_neck=b_neck,
                w_heads_t=w_heads_t.astype(jnp.bfloat16), b_heads=b_heads)


# ----------------------------- pure-JAX reference ----------------------------

def reference_forward(x, params, out_c):
    """Eval-mode forward of the unfolded module in plain JAX / f32."""
    c9, f = params["conv_w"].shape
    c = c9 // 9
    kern = params["conv_w"].reshape(3, 3, c, f).transpose(3, 2, 0, 1)   # OIHW
    y = jax.lax.conv_general_dilated(
        x, kern, window_strides=(1, 1), padding=((1, 1), (1, 1)),
        dimension_numbers=("NCHW", "OIHW", "NCHW"))
    y = y + params["conv_b"].reshape(1, f, 1, 1)
    s = (params["bb_bn_g"] * jax.lax.rsqrt(params["bb_bn_v"] + EPS)).reshape(1, f, 1, 1)
    y = (y - params["bb_bn_m"].reshape(1, f, 1, 1)) * s \
        + params["bb_bn_b"].reshape(1, f, 1, 1)
    y = jnp.maximum(y, 0.0)
    p = jnp.concatenate([jnp.max(y, axis=(2, 3)), jnp.mean(y, axis=(2, 3))], axis=1)

    def bn1d(z, g, b, m, v):
        return (z - m) * (g * jax.lax.rsqrt(v + EPS)) + b

    p = bn1d(p, params["neck_bn_g"], params["neck_bn_b"],
             params["neck_bn_m"], params["neck_bn_v"])
    z = jnp.maximum(p @ params["neck_w"] + params["neck_b"], 0.0)

    outs = []
    for hp in params["heads"]:
        q = bn1d(z, hp["bn1_g"], hp["bn1_b"], hp["bn1_m"], hp["bn1_v"])
        q = q @ hp["w"] + hp["b"]
        q = bn1d(q, hp["bn2_g"], hp["bn2_b"], hp["bn2_m"], hp["bn2_v"])
        outs.append(q)
    return tuple(outs)


# ----------------------------- main ------------------------------------------

if __name__ == "__main__":
    key = jax.random.PRNGKey(0)
    k_x, k_p = jax.random.split(key)

    # small shapes: batch=2, channels=4, spatial=16x16, neck_nf=32, tasks=(3, 5)
    N, C, H, W = 2, 4, 16, 16
    neck_nf, out_c = 32, (3, 5)

    x = jax.random.normal(k_x, (N, C, H, W), jnp.float32)   # NCHW
    params = make_params(k_p, c_in=C, backbone_f=8, neck_nf=neck_nf, out_c=out_c)
    fparams = fold_params(params)

    fwd = jax.jit(lambda xx, pp: multi_task_forward(xx, pp, out_c))
    outs = jax.block_until_ready(fwd(x, fparams))

    assert outs[0].shape == (N, 3) and outs[1].shape == (N, 5)
    assert all(bool(jnp.all(jnp.isfinite(o))) for o in outs)

    # Correctness vs. an f32 pure-JAX reference of the unfolded module.
    # bf16 MXU operands => ~1e-2-scale drift (documented tolerance).
    ref_outs = reference_forward(x, params, out_c)
    for got, want in zip(outs, ref_outs):
        assert got.shape == want.shape
        assert bool(jnp.allclose(got, want, rtol=1e-1, atol=1e-1)), (
            "max abs err = %f" % float(jnp.max(jnp.abs(got - want))))

    print("KERNEL_OK")
</pallas_src>

<mosaic_0001>
module attributes {stable_mosaic.version = 11 : i64} {
  func.func @fused_multitask_kernel(%arg0: i32, %arg1: memref<1x4x256xf32, #tpu.memory_space<vmem>>, %arg2: memref<128x40xbf16, #tpu.memory_space<vmem>>, %arg3: memref<128x1xf32, #tpu.memory_space<vmem>>, %arg4: memref<128x128xbf16, #tpu.memory_space<vmem>>, %arg5: memref<128x128xbf16, #tpu.memory_space<vmem>>, %arg6: memref<128x1xf32, #tpu.memory_space<vmem>>, %arg7: memref<128x128xbf16, #tpu.memory_space<vmem>>, %arg8: memref<128x1xf32, #tpu.memory_space<vmem>>, %arg9: memref<1x128x1xf32, #tpu.memory_space<vmem>>, %arg10: memref<40x256xf32, #tpu.memory_space<vmem>>) attributes {dimension_semantics = [#tpu.dimension_semantics<parallel>], iteration_bounds = array<i64: 2>, scalar_prefetch = 0 : i64, scratch_operands = 1 : i64, tpu.core_type = #tpu.core_type<tc>, window_params = [{transform_indices = @transform_0, window_bounds = array<i64: 1, 4, 256>}, {pipeline_mode = #tpu.pipeline_mode<synchronous>, transform_indices = @transform_1, window_bounds = array<i64: 128, 40>}, {pipeline_mode = #tpu.pipeline_mode<synchronous>, transform_indices = @transform_2, window_bounds = array<i64: 128, 1>}, {pipeline_mode = #tpu.pipeline_mode<synchronous>, transform_indices = @transform_3, window_bounds = array<i64: 128, 128>}, {pipeline_mode = #tpu.pipeline_mode<synchronous>, transform_indices = @transform_4, window_bounds = array<i64: 128, 128>}, {pipeline_mode = #tpu.pipeline_mode<synchronous>, transform_indices = @transform_5, window_bounds = array<i64: 128, 1>}, {pipeline_mode = #tpu.pipeline_mode<synchronous>, transform_indices = @transform_6, window_bounds = array<i64: 128, 128>}, {pipeline_mode = #tpu.pipeline_mode<synchronous>, transform_indices = @transform_7, window_bounds = array<i64: 128, 1>}, {transform_indices = @transform_8, window_bounds = array<i64: 1, 128, 1>}]} {
    %0 = tpu.iota {dimensions = array<i32: 1>} : vector<1x256xi32>
    %c16_i32 = arith.constant 16 : i32
    %c0_i32 = arith.constant 0 : i32
    %1 = arith.cmpi eq, %c16_i32, %c0_i32 : i32
    %c1_i32 = arith.constant 1 : i32
    %2 = arith.select %1, %c1_i32, %c16_i32 : i32
    %3 = vector.broadcast %2 : i32 to vector<1x256xi32>
    %4 = arith.remsi %0, %3 : vector<1x256xi32>
    %c0_i32_0 = arith.constant 0 : i32
    %5 = vector.broadcast %c0_i32_0 : i32 to vector<1x256xi32>
    %6 = arith.cmpi ne, %4, %5 : vector<1x256xi32>
    %c0_i32_1 = arith.constant 0 : i32
    %7 = vector.broadcast %c0_i32_1 : i32 to vector<1x256xi32>
    %8 = arith.cmpi slt, %4, %7 : vector<1x256xi32>
    %c0_i32_2 = arith.constant 0 : i32
    %9 = arith.cmpi slt, %2, %c0_i32_2 : i32
    %10 = vector.broadcast %9 : i1 to vector<1x256xi1>
    %11 = vector.broadcast %10 : vector<1x256xi1> to vector<1x256xi1>
    %12 = arith.xori %8, %11 : vector<1x256xi1>
    %13 = arith.andi %12, %6 : vector<1x256xi1>
    %14 = vector.broadcast %2 : i32 to vector<1x256xi32>
    %15 = arith.addi %4, %14 : vector<1x256xi32>
    %16 = arith.select %13, %15, %4 : vector<1x256xi1>, vector<1x256xi32>
    %c15_i32 = arith.constant 15 : i32
    %17 = vector.broadcast %c15_i32 : i32 to vector<1x256xi32>
    %18 = arith.cmpi ne, %16, %17 : vector<1x256xi32>
    %19 = arith.extui %18 : vector<1x256xi1> to vector<1x256xi32>
    %20 = arith.sitofp %19 : vector<1x256xi32> to vector<1x256xf32>
    %c0_i32_3 = arith.constant 0 : i32
    %21 = vector.broadcast %c0_i32_3 : i32 to vector<1x256xi32>
    %22 = arith.cmpi ne, %16, %21 : vector<1x256xi32>
    %23 = arith.extui %22 : vector<1x256xi1> to vector<1x256xi32>
    %24 = arith.sitofp %23 : vector<1x256xi32> to vector<1x256xf32>
    %cst = arith.constant 0.000000e+00 : f32
    %25 = vector.broadcast %cst : f32 to vector<40x256xf32>
    %c0 = arith.constant 0 : index
    %c0_4 = arith.constant 0 : index
    %26 = vector.load %arg10[%c0, %c0_4] : memref<40x256xf32, #tpu.memory_space<vmem>>, vector<40x256xf32>
    tpu.vector_store %arg10[%c0, %c0_4], %25 {strides = array<i32>} : memref<40x256xf32, #tpu.memory_space<vmem>>, vector<40x256xf32>,
    %c0_5 = arith.constant 0 : index
    %c0_6 = arith.constant 0 : index
    %c0_7 = arith.constant 0 : index
    %27 = vector.load %arg1[%c0_5, %c0_6, %c0_7] : memref<1x4x256xf32, #tpu.memory_space<vmem>>, vector<1x4x256xf32>
    %28 = vector.shape_cast %27 : vector<1x4x256xf32> to vector<4x256xf32>
    %29 = vector.broadcast %20 : vector<1x256xf32> to vector<4x256xf32>
    %30 = arith.mulf %28, %29 : vector<4x256xf32>
    %31 = vector.broadcast %24 : vector<1x256xf32> to vector<4x256xf32>
    %32 = arith.mulf %28, %31 : vector<4x256xf32>
    %33 = vector.extract_strided_slice %30 {offsets = [0, 0], sizes = [4, 239], strides = [1, 1]} : vector<4x256xf32> to vector<4x239xf32>
    %c0_8 = arith.constant 0 : index
    %c17 = arith.constant 17 : index
    %34 = vector.load %arg10[%c0_8, %c17] : memref<40x256xf32, #tpu.memory_space<vmem>>, vector<4x239xf32>
    tpu.vector_store %arg10[%c0_8, %c17], %33 {strides = array<i32>} : memref<40x256xf32, #tpu.memory_space<vmem>>, vector<4x239xf32>,
    %35 = vector.extract_strided_slice %28 {offsets = [0, 0], sizes = [4, 240], strides = [1, 1]} : vector<4x256xf32> to vector<4x240xf32>
    %c4 = arith.constant 4 : index
    %c16 = arith.constant 16 : index
    %36 = vector.load %arg10[%c4, %c16] : memref<40x256xf32, #tpu.memory_space<vmem>>, vector<4x240xf32>
    tpu.vector_store %arg10[%c4, %c16], %35 {strides = array<i32>} : memref<40x256xf32, #tpu.memory_space<vmem>>, vector<4x240xf32>,
    %37 = vector.extract_strided_slice %32 {offsets = [0, 0], sizes = [4, 241], strides = [1, 1]} : vector<4x256xf32> to vector<4x241xf32>
    %c8 = arith.constant 8 : index
    %c15 = arith.constant 15 : index
    %38 = vector.load %arg10[%c8, %c15] : memref<40x256xf32, #tpu.memory_space<vmem>>, vector<4x241xf32>
    tpu.vector_store %arg10[%c8, %c15], %37 {strides = array<i32>} : memref<40x256xf32, #tpu.memory_space<vmem>>, vector<4x241xf32>,
    %39 = vector.extract_strided_slice %30 {offsets = [0, 0], sizes = [4, 255], strides = [1, 1]} : vector<4x256xf32> to vector<4x255xf32>
    %c12 = arith.constant 12 : index
    %c1 = arith.constant 1 : index
    %40 = vector.load %arg10[%c12, %c1] : memref<40x256xf32, #tpu.memory_space<vmem>>, vector<4x255xf32>
    tpu.vector_store %arg10[%c12, %c1], %39 {strides = array<i32>} : memref<40x256xf32, #tpu.memory_space<vmem>>, vector<4x255xf32>,
    %c16_9 = arith.constant 16 : index
    %c0_10 = arith.constant 0 : index
    %41 = vector.load %arg10[%c16_9, %c0_10] : memref<40x256xf32, #tpu.memory_space<vmem>>, vector<4x256xf32>
    tpu.vector_store %arg10[%c16_9, %c0_10], %28 {strides = array<i32>} : memref<40x256xf32, #tpu.memory_space<vmem>>, vector<4x256xf32>,
    %42 = vector.extract_strided_slice %32 {offsets = [0, 1], sizes = [4, 255], strides = [1, 1]} : vector<4x256xf32> to vector<4x255xf32>
    %c20 = arith.constant 20 : index
    %c0_11 = arith.constant 0 : index
    %43 = vector.load %arg10[%c20, %c0_11] : memref<40x256xf32, #tpu.memory_space<vmem>>, vector<4x255xf32>
    tpu.vector_store %arg10[%c20, %c0_11], %42 {strides = array<i32>} : memref<40x256xf32, #tpu.memory_space<vmem>>, vector<4x255xf32>,
    %44 = vector.extract_strided_slice %30 {offsets = [0, 15], sizes = [4, 241], strides = [1, 1]} : vector<4x256xf32> to vector<4x241xf32>
    %c24 = arith.constant 24 : index
    %c0_12 = arith.constant 0 : index
    %45 = vector.load %arg10[%c24, %c0_12] : memref<40x256xf32, #tpu.memory_space<vmem>>, vector<4x241xf32>
    tpu.vector_store %arg10[%c24, %c0_12], %44 {strides = array<i32>} : memref<40x256xf32, #tpu.memory_space<vmem>>, vector<4x241xf32>,
    %46 = vector.extract_strided_slice %28 {offsets = [0, 16], sizes = [4, 240], strides = [1, 1]} : vector<4x256xf32> to vector<4x240xf32>
    %c28 = arith.constant 28 : index
    %c0_13 = arith.constant 0 : index
    %47 = vector.load %arg10[%c28, %c0_13] : memref<40x256xf32, #tpu.memory_space<vmem>>, vector<4x240xf32>
    tpu.vector_store %arg10[%c28, %c0_13], %46 {strides = array<i32>} : memref<40x256xf32, #tpu.memory_space<vmem>>, vector<4x240xf32>,
    %48 = vector.extract_strided_slice %32 {offsets = [0, 17], sizes = [4, 239], strides = [1, 1]} : vector<4x256xf32> to vector<4x239xf32>
    %c32 = arith.constant 32 : index
    %c0_14 = arith.constant 0 : index
    %49 = vector.load %arg10[%c32, %c0_14] : memref<40x256xf32, #tpu.memory_space<vmem>>, vector<4x239xf32>
    tpu.vector_store %arg10[%c32, %c0_14], %48 {strides = array<i32>} : memref<40x256xf32, #tpu.memory_space<vmem>>, vector<4x239xf32>,
    %c0_15 = arith.constant 0 : index
    %c0_16 = arith.constant 0 : index
    %50 = vector.load %arg10[%c0_15, %c0_16] : memref<40x256xf32, #tpu.memory_space<vmem>>, vector<40x256xf32>
    %51 = arith.truncf %50 : vector<40x256xf32> to vector<40x256xbf16>
    %c0_17 = arith.constant 0 : index
    %c0_18 = arith.constant 0 : index
    %52 = vector.load %arg2[%c0_17, %c0_18] : memref<128x40xbf16, #tpu.memory_space<vmem>>, vector<128x40xbf16>
    %cst_19 = arith.constant dense<0.000000e+00> : vector<128x256xf32>
    %53 = tpu.matmul %52, %51, %cst_19 {dimension_numbers = #tpu.dot_dimension_numbers<[1], [0], [0], [1], [0, 0, 1, 1], [], []>} : vector<128x40xbf16>, vector<40x256xbf16>, vector<128x256xf32> -> vector<128x256xf32>
    %c0_20 = arith.constant 0 : index
    %c0_21 = arith.constant 0 : index
    %54 = vector.load %arg3[%c0_20, %c0_21] : memref<128x1xf32, #tpu.memory_space<vmem>>, vector<128x1xf32>
    %55 = vector.broadcast %54 : vector<128x1xf32> to vector<128x256xf32>
    %56 = arith.addf %53, %55 : vector<128x256xf32>
    %cst_22 = arith.constant 0.000000e+00 : f32
    %57 = vector.broadcast %cst_22 : f32 to vector<128x256xf32>
    %58 = arith.maximumf %56, %57 : vector<128x256xf32>
    %cst_23 = arith.constant dense<0xFF800000> : vector<128xf32>
    %59 = vector.multi_reduction <maximumf>, %58, %cst_23 [1] : vector<128x256xf32> to vector<128xf32>
    %60 = vector.shape_cast %59 : vector<128xf32> to vector<128x1xf32>
    %cst_24 = arith.constant dense<0.000000e+00> : vector<128xf32>
    %61 = vector.multi_reduction <add>, %58, %cst_24 [1] : vector<128x256xf32> to vector<128xf32>
    %62 = vector.shape_cast %61 : vector<128xf32> to vector<128x1xf32>
    %cst_25 = arith.constant 3.906250e-03 : f32
    %63 = vector.broadcast %cst_25 : f32 to vector<128x1xf32>
    %64 = arith.mulf %62, %63 : vector<128x1xf32>
    %c0_26 = arith.constant 0 : index
    %c0_27 = arith.constant 0 : index
    %65 = vector.load %arg4[%c0_26, %c0_27] : memref<128x128xbf16, #tpu.memory_space<vmem>>, vector<128x128xbf16>
    %66 = arith.truncf %60 : vector<128x1xf32> to vector<128x1xbf16>
    %cst_28 = arith.constant dense<0.000000e+00> : vector<128x1xf32>
    %67 = tpu.matmul %65, %66, %cst_28 {dimension_numbers = #tpu.dot_dimension_numbers<[1], [0], [0], [1], [0, 0, 1, 1], [], []>} : vector<128x128xbf16>, vector<128x1xbf16>, vector<128x1xf32> -> vector<128x1xf32>
    %c0_29 = arith.constant 0 : index
    %c0_30 = arith.constant 0 : index
    %68 = vector.load %arg5[%c0_29, %c0_30] : memref<128x128xbf16, #tpu.memory_space<vmem>>, vector<128x128xbf16>
    %69 = arith.truncf %64 : vector<128x1xf32> to vector<128x1xbf16>
    %cst_31 = arith.constant dense<0.000000e+00> : vector<128x1xf32>
    %70 = tpu.matmul %68, %69, %cst_31 {dimension_numbers = #tpu.dot_dimension_numbers<[1], [0], [0], [1], [0, 0, 1, 1], [], []>} : vector<128x128xbf16>, vector<128x1xbf16>, vector<128x1xf32> -> vector<128x1xf32>
    %71 = arith.addf %67, %70 : vector<128x1xf32>
    %c0_32 = arith.constant 0 : index
    %c0_33 = arith.constant 0 : index
    %72 = vector.load %arg6[%c0_32, %c0_33] : memref<128x1xf32, #tpu.memory_space<vmem>>, vector<128x1xf32>
    %73 = arith.addf %71, %72 : vector<128x1xf32>
    %cst_34 = arith.constant 0.000000e+00 : f32
    %74 = vector.broadcast %cst_34 : f32 to vector<128x1xf32>
    %75 = arith.maximumf %73, %74 : vector<128x1xf32>
    %c0_35 = arith.constant 0 : index
    %c0_36 = arith.constant 0 : index
    %76 = vector.load %arg7[%c0_35, %c0_36] : memref<128x128xbf16, #tpu.memory_space<vmem>>, vector<128x128xbf16>
    %77 = arith.truncf %75 : vector<128x1xf32> to vector<128x1xbf16>
    %cst_37 = arith.constant dense<0.000000e+00> : vector<128x1xf32>
    %78 = tpu.matmul %76, %77, %cst_37 {dimension_numbers = #tpu.dot_dimension_numbers<[1], [0], [0], [1], [0, 0, 1, 1], [], []>} : vector<128x128xbf16>, vector<128x1xbf16>, vector<128x1xf32> -> vector<128x1xf32>
    %c0_38 = arith.constant 0 : index
    %c0_39 = arith.constant 0 : index
    %79 = vector.load %arg8[%c0_38, %c0_39] : memref<128x1xf32, #tpu.memory_space<vmem>>, vector<128x1xf32>
    %80 = arith.addf %78, %79 : vector<128x1xf32>
    %c0_40 = arith.constant 0 : index
    %c0_41 = arith.constant 0 : index
    %c0_42 = arith.constant 0 : index
    %81 = vector.load %arg9[%c0_40, %c0_41, %c0_42] : memref<1x128x1xf32, #tpu.memory_space<vmem>>, vector<1x128x1xf32>
    %82 = vector.shape_cast %81 : vector<1x128x1xf32> to vector<128x1xf32>
    %83 = vector.shape_cast %80 : vector<128x1xf32> to vector<1x128x1xf32>
    tpu.vector_store %arg9[%c0_40, %c0_41, %c0_42], %83 {strides = array<i32>} : memref<1x128x1xf32, #tpu.memory_space<vmem>>, vector<1x128x1xf32>,
    return
  }
  func.func @transform_0(%arg0: i32) -> (i32, i32, i32) {
    %c0_i32 = arith.constant 0 : i32
    %c0_i32_0 = arith.constant 0 : i32
    %c0_i32_1 = arith.constant 0 : i32
    return %arg0, %c0_i32, %c0_i32_0 : i32, i32, i32
  }
  func.func @transform_1(%arg0: i32) -> (i32, i32) {
    %c0_i32 = arith.constant 0 : i32
    %c0_i32_0 = arith.constant 0 : i32
    %c0_i32_1 = arith.constant 0 : i32
    return %c0_i32, %c0_i32_0 : i32, i32
  }
  func.func @transform_2(%arg0: i32) -> (i32, i32) {
    %c0_i32 = arith.constant 0 : i32
    %c0_i32_0 = arith.constant 0 : i32
    %c0_i32_1 = arith.constant 0 : i32
    return %c0_i32, %c0_i32_0 : i32, i32
  }
  func.func @transform_3(%arg0: i32) -> (i32, i32) {
    %c0_i32 = arith.constant 0 : i32
    %c0_i32_0 = arith.constant 0 : i32
    %c0_i32_1 = arith.constant 0 : i32
    return %c0_i32, %c0_i32_0 : i32, i32
  }
  func.func @transform_4(%arg0: i32) -> (i32, i32) {
    %c0_i32 = arith.constant 0 : i32
    %c0_i32_0 = arith.constant 0 : i32
    %c0_i32_1 = arith.constant 0 : i32
    return %c0_i32, %c0_i32_0 : i32, i32
  }
  func.func @transform_5(%arg0: i32) -> (i32, i32) {
    %c0_i32 = arith.constant 0 : i32
    %c0_i32_0 = arith.constant 0 : i32
    %c0_i32_1 = arith.constant 0 : i32
    return %c0_i32, %c0_i32_0 : i32, i32
  }
  func.func @transform_6(%arg0: i32) -> (i32, i32) {
    %c0_i32 = arith.constant 0 : i32
    %c0_i32_0 = arith.constant 0 : i32
    %c0_i32_1 = arith.constant 0 : i32
    return %c0_i32, %c0_i32_0 : i32, i32
  }
  func.func @transform_7(%arg0: i32) -> (i32, i32) {
    %c0_i32 = arith.constant 0 : i32
    %c0_i32_0 = arith.constant 0 : i32
    %c0_i32_1 = arith.constant 0 : i32
    return %c0_i32, %c0_i32_0 : i32, i32
  }
  func.func @transform_8(%arg0: i32) -> (i32, i32, i32) {
    %c0_i32 = arith.constant 0 : i32
    %c0_i32_0 = arith.constant 0 : i32
    %c0_i32_1 = arith.constant 0 : i32
    return %arg0, %c0_i32, %c0_i32_0 : i32, i32, i32
  }
}

</mosaic_0001>

<llo_original>
// kernel: _lambda_.1
$region0: #{_lambda_.1}
  #allocation0 [shape = 'u32[]', space=smem, size = 0x4, offset = 0x4, fixed_abs, tag = 'smem constant byte address 0x4 - core index']
  #allocation1 [shape = 'u32[144,128]{1,0:T(1,128)}', space=vmem, size = 0x12000, scoped, tag = 'internal scratch']
  #allocation2 [shape = 'f32[40,256]{1,0:T(8,128)}', space=vmem, size = 0xa000, scoped, tag = 'scratch operand']
  %s0 = inlined_call_operand.vmem [shape: f32[2,4,256], index: 0, kind: input, shape index: {}]
  %s1 = inlined_call_operand.vmem [shape: bf16[128,40], index: 1, kind: input, shape index: {}]
  %s2 = inlined_call_operand.vmem [shape: f32[128,1], index: 2, kind: input, shape index: {}]
  %s3 = inlined_call_operand.vmem [shape: bf16[128,128], index: 3, kind: input, shape index: {}]
  %s4 = inlined_call_operand.vmem [shape: bf16[128,128], index: 4, kind: input, shape index: {}]
  %s5 = inlined_call_operand.vmem [shape: f32[128,1], index: 5, kind: input, shape index: {}]
  %s6 = inlined_call_operand.vmem [shape: bf16[128,128], index: 6, kind: input, shape index: {}]
  %s7 = inlined_call_operand.vmem [shape: f32[128,1], index: 7, kind: input, shape index: {}]
  %s8 = inlined_call_operand.vmem [shape: f32[2,128,1], index: 8, kind: output, shape index: {}]
  %s9 = sld [smem:[#allocation0]]
  $region65: #{_lambda_.1} parent=0
    _
  %s11 = ssub.s32 1, %s9
  %s12 = scalar_select 0, %s11, %s9
  loop: start=0, step=1, limit=4
  $region2: #{_lambda_.1} parent=0 // loop_pre_header
    _
  $region3: #{_lambda_.1} parent=0 // loop_header
    %s14 = sphi 0, %s18
    %p15 = scmp.ge.s32.totalorder %s14, 4
    %s24 = sphi 0, %s26
    %s27 = sphi 0, %s24
    %s28 = sphi 0, %s27
    %s44 = sphi 0, %s28
    %s48 = sphi 0, %s48
    %s50 = sphi 0, %s48
    %s51 = sphi 0, %s50
    %s65 = sphi 0, %s51
    %s69 = sphi 0, %s69
    %s71 = sphi 0, %s69
    %s72 = sphi 0, %s71
    %s86 = sphi 0, %s72
    %s90 = sphi 0, %s90
    %s92 = sphi 0, %s90
    %s93 = sphi 0, %s92
    %s107 = sphi 0, %s93
    %s111 = sphi 0, %s111
    %s113 = sphi 0, %s111
    %s114 = sphi 0, %s113
    %s128 = sphi 0, %s114
    %s132 = sphi 0, %s132
    %s134 = sphi 0, %s132
    %s135 = sphi 0, %s134
    %s149 = sphi 0, %s135
    %s153 = sphi 0, %s153
    %s155 = sphi 0, %s153
    %s156 = sphi 0, %s155
    %s170 = sphi 0, %s156
    %s174 = sphi 0, %s174
    %s176 = sphi 0, %s174
    %s177 = sphi 0, %s176
    %s191 = sphi 0, %s177
    %s197 = sphi 0, %s199
    %s200 = sphi 0, %s197
    %s201 = sphi 0, %s200
    %s217 = sphi 0, %s201
  $region4: #{_lambda_.1} parent=0 // loop_header_branch
    %17 = sbr.rel (%p15) target = $region8
  $region5: #{_lambda_.1} parent=0 // loop_body
    %s19 = ssub.s32 %s14, 1
    %s20 = ssub.s32 %s14, 2
    %s21 = sadd.s32 %s14, 1
    %s22 = ssub.s32 %s14, %s21
    %p23 = scmp.eq.s32.totalorder %s22, 0
    %s25 = sadd.s32 %s24, 1
    %s26 = scalar_select %p23, %s24, %s25
    %p29 = pneg %p23
    %p30 = scmp.eq.s32.totalorder %s14, 1
    %p31 = por %p29, %p30
    %p32 = scmp.ne.s32.totalorder %s24, %s27
    %p33 = scmp.eq.s32.totalorder %s14, 0
    %p34 = por %p32, %p33
    %p35 = scmp.ne.s32.totalorder %s24, %s27
    %p36 = scmp.eq.s32.totalorder %s19, 1
    %p37 = por %p35, %p36
    %p38 = scmp.ne.s32.totalorder %s27, %s28
    %p39 = scmp.eq.s32.totalorder %s19, 0
    %p40 = por %p38, %p39
    %p41 = scmp.ne.s32.totalorder %s27, %s28
    %p42 = scmp.eq.s32.totalorder %s20, 1
    %p43 = por %p41, %p42
    %p45 = scmp.ne.s32.totalorder %s28, %s44
    %p46 = scmp.eq.s32.totalorder %s20, 0
    %p47 = por %p45, %p46
    %s49 = sadd.s32 %s48, 1
    %p52 = scmp.eq.s32.totalorder %s14, 1
    %p53 = scmp.ne.s32.totalorder %s48, %s50
    %p54 = scmp.eq.s32.totalorder %s14, 0
    %p55 = por %p53, %p54
    %p56 = scmp.ne.s32.totalorder %s48, %s50
    %p57 = scmp.eq.s32.totalorder %s19, 1
    %p58 = por %p56, %p57
    %p59 = scmp.ne.s32.totalorder %s50, %s51
    %p60 = scmp.eq.s32.totalorder %s19, 0
    %p61 = por %p59, %p60
    %p62 = scmp.ne.s32.totalorder %s50, %s51
    %p63 = scmp.eq.s32.totalorder %s20, 1
    %p64 = por %p62, %p63
    %p66 = scmp.ne.s32.totalorder %s51, %s65
    %p67 = scmp.eq.s32.totalorder %s20, 0
    %p68 = por %p66, %p67
    %s70 = sadd.s32 %s69, 1
    %p73 = scmp.eq.s32.totalorder %s14, 1
    %p74 = scmp.ne.s32.totalorder %s69, %s71
    %p75 = scmp.eq.s32.totalorder %s14, 0
    %p76 = por %p74, %p75
    %p77 = scmp.ne.s32.totalorder %s69, %s71
    %p78 = scmp.eq.s32.totalorder %s19, 1
    %p79 = por %p77, %p78
    %p80 = scmp.ne.s32.totalorder %s71, %s72
    %p81 = scmp.eq.s32.totalorder %s19, 0
    %p82 = por %p80, %p81
    %p83 = scmp.ne.s32.totalorder %s71, %s72
    %p84 = scmp.eq.s32.totalorder %s20, 1
    %p85 = por %p83, %p84
    %p87 = scmp.ne.s32.totalorder %s72, %s86
    %p88 = scmp.eq.s32.totalorder %s20, 0
    %p89 = por %p87, %p88
    %s91 = sadd.s32 %s90, 1
    %p94 = scmp.eq.s32.totalorder %s14, 1
    %p95 = scmp.ne.s32.totalorder %s90, %s92
    %p96 = scmp.eq.s32.totalorder %s14, 0
    %p97 = por %p95, %p96
    %p98 = scmp.ne.s32.totalorder %s90, %s92
    %p99 = scmp.eq.s32.totalorder %s19, 1
    %p100 = por %p98, %p99
    %p101 = scmp.ne.s32.totalorder %s92, %s93
    %p102 = scmp.eq.s32.totalorder %s19, 0
    %p103 = por %p101, %p102
    %p104 = scmp.ne.s32.totalorder %s92, %s93
    %p105 = scmp.eq.s32.totalorder %s20, 1
    %p106 = por %p104, %p105
    %p108 = scmp.ne.s32.totalorder %s93, %s107
    %p109 = scmp.eq.s32.totalorder %s20, 0
    %p110 = por %p108, %p109
    %s112 = sadd.s32 %s111, 1
    %p115 = scmp.eq.s32.totalorder %s14, 1
    %p116 = scmp.ne.s32.totalorder %s111, %s113
    %p117 = scmp.eq.s32.totalorder %s14, 0
    %p118 = por %p116, %p117
    %p119 = scmp.ne.s32.totalorder %s111, %s113
    %p120 = scmp.eq.s32.totalorder %s19, 1
    %p121 = por %p119, %p120
    %p122 = scmp.ne.s32.totalorder %s113, %s114
    %p123 = scmp.eq.s32.totalorder %s19, 0
    %p124 = por %p122, %p123
    %p125 = scmp.ne.s32.totalorder %s113, %s114
    %p126 = scmp.eq.s32.totalorder %s20, 1
    %p127 = por %p125, %p126
    %p129 = scmp.ne.s32.totalorder %s114, %s128
    %p130 = scmp.eq.s32.totalorder %s20, 0
    %p131 = por %p129, %p130
    %s133 = sadd.s32 %s132, 1
    %p136 = scmp.eq.s32.totalorder %s14, 1
    %p137 = scmp.ne.s32.totalorder %s132, %s134
    %p138 = scmp.eq.s32.totalorder %s14, 0
    %p139 = por %p137, %p138
    %p140 = scmp.ne.s32.totalorder %s132, %s134
    %p141 = scmp.eq.s32.totalorder %s19, 1
    %p142 = por %p140, %p141
    %p143 = scmp.ne.s32.totalorder %s134, %s135
    %p144 = scmp.eq.s32.totalorder %s19, 0
    %p145 = por %p143, %p144
    %p146 = scmp.ne.s32.totalorder %s134, %s135
    %p147 = scmp.eq.s32.totalorder %s20, 1
    %p148 = por %p146, %p147
    %p150 = scmp.ne.s32.totalorder %s135, %s149
    %p151 = scmp.eq.s32.totalorder %s20, 0
    %p152 = por %p150, %p151
    %s154 = sadd.s32 %s153, 1
    %p157 = scmp.eq.s32.totalorder %s14, 1
    %p158 = scmp.ne.s32.totalorder %s153, %s155
    %p159 = scmp.eq.s32.totalorder %s14, 0
    %p160 = por %p158, %p159
    %p161 = scmp.ne.s32.totalorder %s153, %s155
    %p162 = scmp.eq.s32.totalorder %s19, 1
    %p163 = por %p161, %p162
    %p164 = scmp.ne.s32.totalorder %s155, %s156
    %p165 = scmp.eq.s32.totalorder %s19, 0
    %p166 = por %p164, %p165
    %p167 = scmp.ne.s32.totalorder %s155, %s156
    %p168 = scmp.eq.s32.totalorder %s20, 1
    %p169 = por %p167, %p168
    %p171 = scmp.ne.s32.totalorder %s156, %s170
    %p172 = scmp.eq.s32.totalorder %s20, 0
    %p173 = por %p171, %p172
    %s175 = sadd.s32 %s174, 1
    %p178 = scmp.eq.s32.totalorder %s14, 1
    %p179 = scmp.ne.s32.totalorder %s174, %s176
    %p180 = scmp.eq.s32.totalorder %s14, 0
    %p181 = por %p179, %p180
    %p182 = scmp.ne.s32.totalorder %s174, %s176
    %p183 = scmp.eq.s32.totalorder %s19, 1
    %p184 = por %p182, %p183
    %p185 = scmp.ne.s32.totalorder %s176, %s177
    %p186 = scmp.eq.s32.totalorder %s19, 0
    %p187 = por %p185, %p186
    %p188 = scmp.ne.s32.totalorder %s176, %s177
    %p189 = scmp.eq.s32.totalorder %s20, 1
    %p190 = por %p188, %p189
    %p192 = scmp.ne.s32.totalorder %s177, %s191
    %p193 = scmp.eq.s32.totalorder %s20, 0
    %p194 = por %p192, %p193
    %s195 = ssub.s32 %s14, %s21
    %p196 = scmp.eq.s32.totalorder %s195, 0
    %s198 = sadd.s32 %s197, 1
    %s199 = scalar_select %p196, %s197, %s198
    %p202 = pneg %p196
    %p203 = scmp.eq.s32.totalorder %s14, 1
    %p204 = por %p202, %p203
    %p205 = scmp.ne.s32.totalorder %s197, %s200
    %p206 = scmp.eq.s32.totalorder %s14, 0
    %p207 = por %p205, %p206
    %p208 = scmp.ne.s32.totalorder %s197, %s200
    %p209 = scmp.eq.s32.totalorder %s19, 1
    %p210 = por %p208, %p209
    %p211 = scmp.ne.s32.totalorder %s200, %s201
    %p212 = scmp.eq.s32.totalorder %s19, 0
    %p213 = por %p211, %p212
    %p214 = scmp.ne.s32.totalorder %s200, %s201
    %p215 = scmp.eq.s32.totalorder %s20, 1
    %p216 = por %p214, %p215
    %p218 = scmp.ne.s32.totalorder %s201, %s217
    %p219 = scmp.eq.s32.totalorder %s20, 0
    %p220 = por %p218, %p219
    %p221 = scmp.le.s32.totalorder 1, %s14
    %p222 = scmp.lt.s32.totalorder %s14, 3
    %p223 = pnand %p221, %p222
    %p224 = pneg %p223
    // Predicated region
    $region9: #{_lambda_.1} parent=5 // pred_check
      _
    $region10: #{_lambda_.1} parent=5 // pred_check_branch
      %226 = sbr.rel (%p223) target = $region12
    $region11: #{_lambda_.1} parent=5 // pred_region
      %s227 = ssub.s32 %s14, 1
      // Predicated region
      $region13: #{_lambda_.1} parent=11 // pred_check
        %p228 = pneg %p61
      $region14: #{_lambda_.1} parent=11 // pred_check_branch
        %230 = sbr.rel (%p228) target = $region16
      $region15: #{_lambda_.1} parent=11 // pred_region
        _
      $region16: #{_lambda_.1} parent=11 // pred_fallthru
        _
      // Predicated region
      $region17: #{_lambda_.1} parent=11 // pred_check
        %p231 = pneg %p82
      $region18: #{_lambda_.1} parent=11 // pred_check_branch
        %233 = sbr.rel (%p231) target = $region20
      $region19: #{_lambda_.1} parent=11 // pred_region
        _
      $region20: #{_lambda_.1} parent=11 // pred_fallthru
        _
      // Predicated region
      $region21: #{_lambda_.1} parent=11 // pred_check
        %p234 = pneg %p103
      $region22: #{_lambda_.1} parent=11 // pred_check_branch
        %236 = sbr.rel (%p234) target = $region24
      $region23: #{_lambda_.1} parent=11 // pred_region
        _
      $region24: #{_lambda_.1} parent=11 // pred_fallthru
        _
      // Predicated region
      $region25: #{_lambda_.1} parent=11 // pred_check
        %p237 = pneg %p124
      $region26: #{_lambda_.1} parent=11 // pred_check_branch
        %239 = sbr.rel (%p237) target = $region28
      $region27: #{_lambda_.1} parent=11 // pred_region
        _
      $region28: #{_lambda_.1} parent=11 // pred_fallthru
        _
      // Predicated region
      $region29: #{_lambda_.1} parent=11 // pred_check
        %p240 = pneg %p145
      $region30: #{_lambda_.1} parent=11 // pred_check_branch
        %242 = sbr.rel (%p240) target = $region32
      $region31: #{_lambda_.1} parent=11 // pred_region
        _
      $region32: #{_lambda_.1} parent=11 // pred_fallthru
        _
      // Predicated region
      $region33: #{_lambda_.1} parent=11 // pred_check
        %p243 = pneg %p166
      $region34: #{_lambda_.1} parent=11 // pred_check_branch
        %245 = sbr.rel (%p243) target = $region36
      $region35: #{_lambda_.1} parent=11 // pred_region
        _
      $region36: #{_lambda_.1} parent=11 // pred_fallthru
        _
      // Predicated region
      $region37: #{_lambda_.1} parent=11 // pred_check
        %p246 = pneg %p187
      $region38: #{_lambda_.1} parent=11 // pred_check_branch
        %248 = sbr.rel (%p246) target = $region40
      $region39: #{_lambda_.1} parent=11 // pred_region
        _
      $region40: #{_lambda_.1} parent=11 // pred_fallthru
        _
    $region12: #{_lambda_.1} parent=5 // pred_fallthru
      _
    %p249 = scmp.lt.s32.totalorder %s14, 2
    // Predicated region
    $region41: #{_lambda_.1} parent=5 // pred_check
      %p250 = pneg %p249
    $region42: #{_lambda_.1} parent=5 // pred_check_branch
      %252 = sbr.rel (%p250) target = $region44
    $region43: #{_lambda_.1} parent=5 // pred_region
      // Predicated region
      $region45: #{_lambda_.1} parent=43 // pred_check
        %p253 = pneg %p34
      $region46: #{_lambda_.1} parent=43 // pred_check_branch
        %255 = sbr.rel (%p253) target = $region48
      $region47: #{_lambda_.1} parent=43 // pred_region
        %p256 = scmp.lt.s32.totalorder %s14, 1
        %s257 = scalar_select %p256, %s14, 1
        %s258 = smul.addr %s257, 2
        %s259 = smul.addr %s258, 4
        %s260 = scalar_lea.vmem %s0, %s259
      $region48: #{_lambda_.1} parent=43 // pred_fallthru
        _
    $region44: #{_lambda_.1} parent=5 // pred_fallthru
      _
    %p261 = scmp.le.s32.totalorder 1, %s14
    %p262 = scmp.lt.s32.totalorder %s14, 3
    %p263 = pnand %p261, %p262
    %p264 = pneg %p263
    // Predicated region
    $region49: #{_lambda_.1} parent=5 // pred_check
      _
    $region50: #{_lambda_.1} parent=5 // pred_check_branch
      %266 = sbr.rel (%p263) target = $region52
    $region51: #{_lambda_.1} parent=5 // pred_region
      %s267 = ssub.s32 %s14, 1
      %p268 = scmp.lt.s32.totalorder %s19, 1
      %s269 = scalar_select %p268, %s19, 1
      %s270 = smul.addr %s269, 2
      %s271 = smul.addr %s270, 4
      %s272 = scalar_lea.vmem %s0, %s271
      %p273 = pneg %p40
      %p274 = pneg %p37
      %p275 = pneg %p61
      %p276 = pneg %p58
      %p277 = pneg %p82
      %p278 = pneg %p79
      %p279 = pneg %p103
      %p280 = pneg %p100
      %p281 = pneg %p124
      %p282 = pneg %p121
      %p283 = pneg %p145
      %p284 = pneg %p142
      %p285 = pneg %p166
      %p286 = pneg %p163
      %p287 = pneg %p187
      %p288 = pneg %p184
      %p289 = pneg %p213
      %p290 = pneg %p210
      %p291 = scmp.lt.s32.totalorder %s19, 1
      %s292 = scalar_select %p291, %s19, 1
      %s293 = smul.addr %s292, 16
      %s294 = smul.addr %s293, 8
      %s295 = scalar_lea.vmem %s8, %s294
      %p296 = scmp.lt.s32.totalorder %s19, 1
      %s297 = scalar_select %p296, %s19, 1
      %s298 = smul.addr %s297, 2
      %s299 = smul.addr %s298, 4
      %s300 = scalar_lea.vmem %s0, %s299
      %p301 = scmp.lt.s32.totalorder %s19, 1
      %s302 = scalar_select %p301, %s19, 1
      %s303 = smul.addr %s302, 16
      %s304 = smul.addr %s303, 8
      %s305 = scalar_lea.vmem %s8, %s304
      %v307 = vlaneseq
      %v308 = vand.u32 %v307, 127
      %v309 = vadd.s32 %v308, 128
      %vm310 = vcmp.lt.s32.totalorder %v308, 0
      %v311 = vsub.s32 0, %v308
      %v312 = vsel %vm310, %v311, %v308
      %v313 = vshrl.u32 %v312, 4
      %v314 = vand.u32 %v312, 15
      %v315 = vsub.s32 0, %v314
      %v316 = vsel %vm310, %v315, %v314
      %vm317 = vcmp.lt.s32.totalorder %v309, 0
      %v318 = vsub.s32 0, %v309
      %v319 = vsel %vm317, %v318, %v309
      %v320 = vshrl.u32 %v319, 4
      %v321 = vand.u32 %v319, 15
      %v322 = vsub.s32 0, %v321
      %v323 = vsel %vm317, %v322, %v321
      %vm324 = vcmp.ne.s32.totalorder %v316, 0
      %vm325 = vcmp.ne.s32.totalorder %v323, 0
      %vm326 = vcmp.lt.s32.totalorder %v316, 0
      %vm327 = vcmp.lt.s32.totalorder %v323, 0
      %vm328 = vmand %vm326, %vm324
      %vm329 = vmand %vm327, %vm325
      %v330 = vadd.s32 %v316, 16
      %v331 = vadd.s32 %v323, 16
      %v332 = vsel %vm328, %v330, %v316
      %v333 = vsel %vm329, %v331, %v323
      %vm334 = vcmp.ne.s32.totalorder %v332, 15
      %vm335 = vcmp.ne.s32.totalorder %v333, 15
      %v336 = vsel %vm334, 1, 0
      %v337 = vsel %vm335, 1, 0
      %v338 = vcvt.s32.f32 %v336
      %v339 = vcvt.s32.f32 %v337
      %vm340 = vcmp.ne.s32.totalorder %v332, 0
      %vm341 = vcmp.ne.s32.totalorder %v333, 0
      %v342 = vsel %vm340, 1, 0
      %v343 = vsel %vm341, 1, 0
      %v344 = vcvt.s32.f32 %v342
      %v345 = vcvt.s32.f32 %v343
      %346 = vst [vmem:[#allocation2] sm:$0xff] 0.0
      %347 = vst [vmem:[#allocation2 + $0x8] sm:$0xff] 0.0
      %348 = vst [vmem:[#allocation2 + $0x10] sm:$0xff] 0.0
      %349 = vst [vmem:[#allocation2 + $0x18] sm:$0xff] 0.0
      %350 = vst [vmem:[#allocation2 + $0x20] sm:$0xff] 0.0
      %351 = vst [vmem:[#allocation2 + $0x28] sm:$0xff] 0.0
      %352 = vst [vmem:[#allocation2 + $0x30] sm:$0xff] 0.0
      %353 = vst [vmem:[#allocation2 + $0x38] sm:$0xff] 0.0
      %354 = vst [vmem:[#allocation2 + $0x40] sm:$0xff] 0.0
      %355 = vst [vmem:[#allocation2 + $0x48] sm:$0xff] 0.0
      %v356 = vld [vmem:[%s300] sm:$0xff]
      %v359 = vcombine.low %v338, %v339
      %v361 = vmul.f32 %v356, %v359
      %v364 = vcombine.low %v344, %v345
      %v366 = vmul.f32 %v356, %v364
      %v368 = vcombine.high %v361, %v361
      %369 = vrot.lane.b32.xlu0 %v361, 17
      %v370 = vpop.permute.xlu0 %369
      %371 = vrot.lane.b32.xlu0 %v368, 17
      %v372 = vpop.permute.xlu0 %371
      %vm373 = vcmask 138240
      %v374 = vsel %vm373, %v370, %v372
      %vm377 = vcmask 1043592
      %378 = vst.msk [vmem:[#allocation2] sm:$0xf] %vm377, %v370
      %379 = vst [vmem:[#allocation2 + $0x8] sm:$0xf] %v374
      %v381 = vcombine.low %v356, %v356
      %382 = vrot.lane.b32.xlu0 %v381, 16
      %v383 = vpop.permute.xlu0 %382
      %384 = vrot.lane.b32.xlu0 %v356, 16
      %v385 = vpop.permute.xlu0 %384
      %vm386 = vcmask 130048
      %v387 = vsel %vm386, %v383, %v385
      %vm390 = vcmask 1047684
      %391 = vst.msk [vmem:[#allocation2] sm:$0xf0] %vm390, %v383
      %392 = vst [vmem:[#allocation2 + $0x8] sm:$0xf0] %v387
      %v394 = vcombine.high %v366, %v366
      %395 = vrot.lane.b32.xlu0 %v366, 15
      %v396 = vpop.permute.xlu0 %395
      %397 = vrot.lane.b32.xlu0 %v394, 15
      %v398 = vpop.permute.xlu0 %397
      %vm399 = vcmask 121856
      %v400 = vsel %vm399, %v396, %v398
      %vm403 = vcmask 1043576
      %404 = vst.msk [vmem:[#allocation2 + $0x10] sm:$0xf] %vm403, %v396
      %405 = vst [vmem:[#allocation2 + $0x18] sm:$0xf] %v400
      %v406 = vcombine.low %v361, %v361
      %407 = vrot.lane.b32.xlu0 %v406, 1
      %v408 = vpop.permute.xlu0 %407
      %409 = vrot.lane.b32.xlu0 %v361, 1
      %v410 = vpop.permute.xlu0 %409
      %vm411 = vcmask 7168
      %v412 = vsel %vm411, %v408, %v410
      %vm415 = vcmask 1047564
      %416 = vst.msk [vmem:[#allocation2 + $0x10] sm:$0xf0] %vm415, %v408
      %417 = vst [vmem:[#allocation2 + $0x18] sm:$0xf0] %v412
      %v418 = vcombine.high %v356, %v356
      %420 = vst [vmem:[#allocation2 + $0x20] sm:$0xf] %v356
      %421 = vst [vmem:[#allocation2 + $0x28] sm:$0xf] %v418
      %v422 = vcombine.low %v366, %v366
      %423 = vrot.lane.b32.xlu0 %v422, 127
      %v424 = vpop.permute.xlu0 %423
      %425 = vrot.lane.b32.xlu0 %v366, 127
      %v426 = vpop.permute.xlu0 %425
      %vm427 = vcmask 1039360
      %v428 = vsel %vm427, %v424, %v426
      %431 = vst [vmem:[#allocation2 + $0x20] sm:$0xf0] %v428
      %vm432 = vcmask 1039364
      %433 = vst.msk [vmem:[#allocation2 + $0x28] sm:$0xf0] %vm432, %v426
      %434 = vrot.lane.b32.xlu0 %v361, 113
      %v435 = vpop.permute.xlu0 %434
      %436 = vrot.lane.b32.xlu0 %v368, 113
      %v437 = vpop.permute.xlu0 %436
      %vm438 = vcmask 924672
      %v439 = vsel %vm438, %v435, %v437
      %442 = vst [vmem:[#allocation2 + $0x30] sm:$0xf] %v439
      %vm443 = vcmask 920576
      %444 = vst.msk [vmem:[#allocation2 + $0x38] sm:$0xf] %vm443, %v437
      %445 = vrot.lane.b32.xlu0 %v381, 112
      %v446 = vpop.permute.xlu0 %445
      %447 = vrot.lane.b32.xlu0 %v356, 112
      %v448 = vpop.permute.xlu0 %447
      %vm449 = vcmask 916480
      %v450 = vsel %vm449, %v446, %v448
      %453 = vst [vmem:[#allocation2 + $0x30] sm:$0xf0] %v450
      %vm454 = vcmask 916484
      %455 = vst.msk [vmem:[#allocation2 + $0x38] sm:$0xf0] %vm454, %v448
      %456 = vrot.lane.b32.xlu0 %v366, 111
      %v457 = vpop.permute.xlu0 %456
      %458 = vrot.lane.b32.xlu0 %v394, 111
      %v459 = vpop.permute.xlu0 %458
      %vm460 = vcmask 908288
      %v461 = vsel %vm460, %v457, %v459
      %464 = vst [vmem:[#allocation2 + $0x40] sm:$0xf] %v461
      %vm465 = vcmask 904192
      %466 = vst.msk [vmem:[#allocation2 + $0x48] sm:$0xf] %vm465, %v459
      %v467 = vld [vmem:[#allocation2] sm:$0xff]
      %v468 = vld [vmem:[#allocation2 + $0x8] sm:$0xff]
      %v469 = vld [vmem:[#allocation2 + $0x10] sm:$0xff]
      %v470 = vld [vmem:[#allocation2 + $0x18] sm:$0xff]
      %v471 = vld [vmem:[#allocation2 + $0x20] sm:$0xff]
      %v472 = vld [vmem:[#allocation2 + $0x28] sm:$0xff]
      %v473 = vld [vmem:[#allocation2 + $0x30] sm:$0xff]
      %v474 = vld [vmem:[#allocation2 + $0x38] sm:$0xff]
      %v475 = vld [vmem:[#allocation2 + $0x40] sm:$0xff]
      %v476 = vld [vmem:[#allocation2 + $0x48] sm:$0xff]
      %v477 = vpack.c.bf16 %v469, %v467
      %v478 = vpack.c.bf16 %v470, %v468
      %v479 = vpack.c.bf16 %v473, %v471
      %v480 = vpack.c.bf16 %v474, %v472
      %v481 = vpack.c.bf16 %v475, %v475
      %v482 = vpack.c.bf16 %v476, %v476
      %v483 = vld [vmem:[%s1] sm:$0xf]
      %v484 = vld [vmem:[%s1 + $0x4] sm:$0xf]
      %v485 = vld [vmem:[%s1 + $0x8] sm:$0xf]
      %v486 = vld [vmem:[%s1 + $0xc] sm:$0xf]
      %v487 = vld [vmem:[%s1 + $0x10] sm:$0xf]
      %v488 = vld [vmem:[%s1 + $0x14] sm:$0xf]
      %v489 = vld [vmem:[%s1 + $0x18] sm:$0xf]
      %v490 = vld [vmem:[%s1 + $0x1c] sm:$0xf]
      %v491 = vld [vmem:[%s1 + $0x20] sm:$0xf]
      %v492 = vld [vmem:[%s1 + $0x24] sm:$0xf]
      %v493 = vld [vmem:[%s1 + $0x28] sm:$0xf]
      %v494 = vld [vmem:[%s1 + $0x2c] sm:$0xf]
      %v495 = vld [vmem:[%s1 + $0x30] sm:$0xf]
      %v496 = vld [vmem:[%s1 + $0x34] sm:$0xf]
      %v497 = vld [vmem:[%s1 + $0x38] sm:$0xf]
      %v498 = vld [vmem:[%s1 + $0x3c] sm:$0xf]
      %v499 = vld [vmem:[%s2] sm:$0xff]
      %v500 = vld [vmem:[%s2 + $0x8] sm:$0xff]
      %v501 = vld [vmem:[%s2 + $0x10] sm:$0xff]
      %v502 = vld [vmem:[%s2 + $0x18] sm:$0xff]
      %v503 = vld [vmem:[%s2 + $0x20] sm:$0xff]
      %v504 = vld [vmem:[%s2 + $0x28] sm:$0xff]
      %v505 = vld [vmem:[%s2 + $0x30] sm:$0xff]
      %v506 = vld [vmem:[%s2 + $0x38] sm:$0xff]
      %v507 = vld [vmem:[%s2 + $0x40] sm:$0xff]
      %v508 = vld [vmem:[%s2 + $0x48] sm:$0xff]
      %v509 = vld [vmem:[%s2 + $0x50] sm:$0xff]
      %v510 = vld [vmem:[%s2 + $0x58] sm:$0xff]
      %v511 = vld [vmem:[%s2 + $0x60] sm:$0xff]
      %v512 = vld [vmem:[%s2 + $0x68] sm:$0xff]
      %v513 = vld [vmem:[%s2 + $0x70] sm:$0xff]
      %v514 = vld [vmem:[%s2 + $0x78] sm:$0xff]
      %516 = vset.pattern.permute.xlu0 0
      %517 = vperm.xlu0 %516, %v499
      %v518 = vpop.permute.xlu0 %517
      %521 = vset.pattern.permute.xlu0 0
      %522 = vperm.xlu0 %521, %v500
      %v523 = vpop.permute.xlu0 %522
      %526 = vset.pattern.permute.xlu0 0
      %527 = vperm.xlu0 %526, %v501
      %v528 = vpop.permute.xlu0 %527
      %531 = vset.pattern.permute.xlu0 0
      %532 = vperm.xlu0 %531, %v502
      %v533 = vpop.permute.xlu0 %532
      %536 = vset.pattern.permute.xlu0 0
      %537 = vperm.xlu0 %536, %v503
      %v538 = vpop.permute.xlu0 %537
      %541 = vset.pattern.permute.xlu0 0
      %542 = vperm.xlu0 %541, %v504
      %v543 = vpop.permute.xlu0 %542
      %546 = vset.pattern.permute.xlu0 0
      %547 = vperm.xlu0 %546, %v505
      %v548 = vpop.permute.xlu0 %547
      %551 = vset.pattern.permute.xlu0 0
      %552 = vperm.xlu0 %551, %v506
      %v553 = vpop.permute.xlu0 %552
      %556 = vset.pattern.permute.xlu0 0
      %557 = vperm.xlu0 %556, %v507
      %v558 = vpop.permute.xlu0 %557
      %561 = vset.pattern.permute.xlu0 0
      %562 = vperm.xlu0 %561, %v508
      %v563 = vpop.permute.xlu0 %562
      %566 = vset.pattern.permute.xlu0 0
      %567 = vperm.xlu0 %566, %v509
      %v568 = vpop.permute.xlu0 %567
      %571 = vset.pattern.permute.xlu0 0
      %572 = vperm.xlu0 %571, %v510
      %v573 = vpop.permute.xlu0 %572
      %576 = vset.pattern.permute.xlu0 0
      %577 = vperm.xlu0 %576, %v511
      %v578 = vpop.permute.xlu0 %577
      %581 = vset.pattern.permute.xlu0 0
      %582 = vperm.xlu0 %581, %v512
      %v583 = vpop.permute.xlu0 %582
      %586 = vset.pattern.permute.xlu0 0
      %587 = vperm.xlu0 %586, %v513
      %v588 = vpop.permute.xlu0 %587
      %591 = vset.pattern.permute.xlu0 0
      %592 = vperm.xlu0 %591, %v514
      %v593 = vpop.permute.xlu0 %592
      %v611 = vunpack.c.l.b16 %v483
      %v612 = vunpack.c.l.b16 %v484
      %v613 = vunpack.c.l.b16 %v485
      %v614 = vunpack.c.l.b16 %v486
      %v615 = vunpack.c.l.b16 %v487
      %v616 = vunpack.c.l.b16 %v488
      %v617 = vunpack.c.l.b16 %v489
      %v618 = vunpack.c.l.b16 %v490
      %v619 = vunpack.c.l.b16 %v491
      %v620 = vunpack.c.l.b16 %v492
      %v621 = vunpack.c.l.b16 %v493
      %v622 = vunpack.c.l.b16 %v494
      %v623 = vunpack.c.l.b16 %v495
      %v624 = vunpack.c.l.b16 %v496
      %v625 = vunpack.c.l.b16 %v497
      %v626 = vunpack.c.l.b16 %v498
      %v627 = vpack.c.b16 %v612, %v611
      %v628 = vpack.c.b16 %v614, %v613
      %v629 = vpack.c.b16 %v616, %v615
      %v630 = vpack.c.b16 %v618, %v617
      %v631 = vpack.c.b16 %v620, %v619
      %v632 = vpack.c.b16 %v622, %v621
      %v633 = vpack.c.b16 %v624, %v623
      %v634 = vpack.c.b16 %v626, %v625
      %vm635 = vcmask 326656
      %v637 = vsel %vm635, %v627, 0
      %v640 = vsel %vm635, %v628, 0
      %v643 = vsel %vm635, %v629, 0
      %v646 = vsel %vm635, %v630, 0
      %v649 = vsel %vm635, %v631, 0
      %v652 = vsel %vm635, %v632, 0
      %v655 = vsel %vm635, %v633, 0
      %v658 = vsel %vm635, %v634, 0
      %vm660 = vcmask 1043456
      %v662 = vsel %vm660, %v481, 0
      %v665 = vsel %vm660, %v482, 0
      %667 = vmatprep.subr.bf16.mxu0 %v478
      %668 = vmatpush1.bf16.msra.mxu0 %v477
      %669 = vmatprep.subr.bf16.mxu0 %v480
      %670 = vmatpush1.bf16.msra.mxu0 %v479
      %671 = vmatprep.subr.bf16.mxu0 %v665
      %672 = vmatpush1.bf16.msra.mxu0 %v662
      %673 = vmatprep.subr.bf16.mxu0 0
      %674 = vmatpush1.bf16.msra.mxu0 0
      %675 = vmatprep.subr.bf16.mxu0 0
      %676 = vmatpush1.bf16.msra.mxu0 0
      %677 = vmatprep.subr.bf16.mxu0 0
      %678 = vmatpush1.bf16.msra.mxu0 0
      %679 = vmatprep.subr.bf16.mxu0 0
      %680 = vmatpush1.bf16.msra.mxu0 0
      %681 = vmatprep.subr.bf16.mxu0 0
      %682 = vmatpush1.bf16.msra.mxu0 0
      %683 = vmatprep.subr.bf16.mxu0 0
      %684 = vmatpush1.bf16.msra.mxu0 0
      %685 = vmatprep.subr.bf16.mxu0 0
      %686 = vmatpush1.bf16.msra.mxu0 0
      %687 = vmatprep.subr.bf16.mxu0 0
      %688 = vmatpush1.bf16.msra.mxu0 0
      %689 = vmatprep.subr.bf16.mxu0 0
      %690 = vmatpush1.bf16.msra.mxu0 0
      %691 = vmatprep.subr.bf16.mxu0 0
      %692 = vmatpush1.bf16.msra.mxu0 0
      %693 = vmatprep.subr.bf16.mxu0 0
      %694 = vmatpush1.bf16.msra.mxu0 0
      %695 = vmatprep.subr.bf16.mxu0 0
      %696 = vmatpush1.bf16.msra.mxu0 0
      %697 = vmatprep.subr.bf16.mxu0 0
      %698 = vmatpush1.bf16.msra.mxu0 0
      %699 = vmatprep.mubr.bf16.mxu0 0
      %700 = vmatmul.mubr.bf16.gmra.mrb[0].mxu0 %v637
      %v701 = vpop.f32.mrb[0].mxu0
      %v702 = vadd.f32 %v518, %v701
      %v703 = vpop.f32.mrb[0].mxu0
      %v704 = vadd.f32 %v518, %v703
      %v705 = vpop.f32.mrb[0].mxu0
      %v706 = vadd.f32 %v523, %v705
      %v707 = vpop.f32.mrb[0].mxu0
      %v708 = vadd.f32 %v523, %v707
      %709 = vmatprep.mubr.bf16.mxu0 0
      %710 = vmatmul.mubr.bf16.gmra.mrb[0].mxu0 %v640
      %v711 = vpop.f32.mrb[0].mxu0
      %v712 = vadd.f32 %v528, %v711
      %v713 = vpop.f32.mrb[0].mxu0
      %v714 = vadd.f32 %v528, %v713
      %v715 = vpop.f32.mrb[0].mxu0
      %v716 = vadd.f32 %v533, %v715
      %v717 = vpop.f32.mrb[0].mxu0
      %v718 = vadd.f32 %v533, %v717
      %719 = vmatprep.mubr.bf16.mxu0 0
      %720 = vmatmul.mubr.bf16.gmra.mrb[0].mxu0 %v643
      %v721 = vpop.f32.mrb[0].mxu0
      %v722 = vadd.f32 %v538, %v721
      %v723 = vpop.f32.mrb[0].mxu0
      %v724 = vadd.f32 %v538, %v723
      %v725 = vpop.f32.mrb[0].mxu0
      %v726 = vadd.f32 %v543, %v725
      %v727 = vpop.f32.mrb[0].mxu0
      %v728 = vadd.f32 %v543, %v727
      %729 = vmatprep.mubr.bf16.mxu0 0
      %730 = vmatmul.mubr.bf16.gmra.mrb[0].mxu0 %v646
      %v731 = vpop.f32.mrb[0].mxu0
      %v732 = vadd.f32 %v548, %v731
      %v733 = vpop.f32.mrb[0].mxu0
      %v734 = vadd.f32 %v548, %v733
      %v735 = vpop.f32.mrb[0].mxu0
      %v736 = vadd.f32 %v553, %v735
      %v737 = vpop.f32.mrb[0].mxu0
      %v738 = vadd.f32 %v553, %v737
      %739 = vmatprep.mubr.bf16.mxu0 0
      %740 = vmatmul.mubr.bf16.gmra.mrb[0].mxu0 %v649
      %v741 = vpop.f32.mrb[0].mxu0
      %v742 = vadd.f32 %v558, %v741
      %v743 = vpop.f32.mrb[0].mxu0
      %v744 = vadd.f32 %v558, %v743
      %v745 = vpop.f32.mrb[0].mxu0
      %v746 = vadd.f32 %v563, %v745
      %v747 = vpop.f32.mrb[0].mxu0
      %v748 = vadd.f32 %v563, %v747
      %749 = vmatprep.mubr.bf16.mxu0 0
      %750 = vmatmul.mubr.bf16.gmra.mrb[0].mxu0 %v652
      %v751 = vpop.f32.mrb[0].mxu0
      %v752 = vadd.f32 %v568, %v751
      %v753 = vpop.f32.mrb[0].mxu0
      %v754 = vadd.f32 %v568, %v753
      %v755 = vpop.f32.mrb[0].mxu0
      %v756 = vadd.f32 %v573, %v755
      %v757 = vpop.f32.mrb[0].mxu0
      %v758 = vadd.f32 %v573, %v757
      %759 = vmatprep.mubr.bf16.mxu0 0
      %760 = vmatmul.mubr.bf16.gmra.mrb[0].mxu0 %v655
      %v761 = vpop.f32.mrb[0].mxu0
      %v762 = vadd.f32 %v578, %v761
      %v763 = vpop.f32.mrb[0].mxu0
      %v764 = vadd.f32 %v578, %v763
      %v765 = vpop.f32.mrb[0].mxu0
      %v766 = vadd.f32 %v583, %v765
      %v767 = vpop.f32.mrb[0].mxu0
      %v768 = vadd.f32 %v583, %v767
      %769 = vmatprep.mubr.bf16.mxu0 0
      %770 = vmatmul.mubr.bf16.gmra.mrb[0].mxu0 %v658
      %v771 = vpop.f32.mrb[0].mxu0
      %v772 = vadd.f32 %v588, %v771
      %v773 = vpop.f32.mrb[0].mxu0
      %v774 = vadd.f32 %v588, %v773
      %v775 = vpop.f32.mrb[0].mxu0
      %v776 = vadd.f32 %v593, %v775
      %v777 = vpop.f32.mrb[0].mxu0
      %v778 = vadd.f32 %v593, %v777
      %779 = vdwg.mxu0
      %v780 = vmax.f32 %v702, 0.0
      %v781 = vmax.f32 %v704, 0.0
      %v782 = vmax.f32 %v706, 0.0
      %v783 = vmax.f32 %v708, 0.0
      %v784 = vmax.f32 %v712, 0.0
      %v785 = vmax.f32 %v714, 0.0
      %v786 = vmax.f32 %v716, 0.0
      %v787 = vmax.f32 %v718, 0.0
      %v788 = vmax.f32 %v722, 0.0
      %v789 = vmax.f32 %v724, 0.0
      %v790 = vmax.f32 %v726, 0.0
      %v791 = vmax.f32 %v728, 0.0
      %v792 = vmax.f32 %v732, 0.0
      %v793 = vmax.f32 %v734, 0.0
      %v794 = vmax.f32 %v736, 0.0
      %v795 = vmax.f32 %v738, 0.0
      %v796 = vmax.f32 %v742, 0.0
      %v797 = vmax.f32 %v744, 0.0
      %v798 = vmax.f32 %v746, 0.0
      %v799 = vmax.f32 %v748, 0.0
      %v800 = vmax.f32 %v752, 0.0
      %v801 = vmax.f32 %v754, 0.0
      %v802 = vmax.f32 %v756, 0.0
      %v803 = vmax.f32 %v758, 0.0
      %v804 = vmax.f32 %v762, 0.0
      %v805 = vmax.f32 %v764, 0.0
      %v806 = vmax.f32 %v766, 0.0
      %v807 = vmax.f32 %v768, 0.0
      %v808 = vmax.f32 %v772, 0.0
      %v809 = vmax.f32 %v774, 0.0
      %v810 = vmax.f32 %v776, 0.0
      %v811 = vmax.f32 %v778, 0.0
      %v812 = vmax.f32 %v780, %v781
      %813 = vmax.xlane.f32.xlu0 %v812
      %v814 = vpop.xlane.xlu0 %813
      %v815 = vmax.f32 %v782, %v783
      %816 = vmax.xlane.f32.xlu0 %v815
      %v817 = vpop.xlane.xlu0 %816
      %v818 = vmax.f32 %v784, %v785
      %819 = vmax.xlane.f32.xlu0 %v818
      %v820 = vpop.xlane.xlu0 %819
      %v821 = vmax.f32 %v786, %v787
      %822 = vmax.xlane.f32.xlu0 %v821
      %v823 = vpop.xlane.xlu0 %822
      %v824 = vmax.f32 %v788, %v789
      %825 = vmax.xlane.f32.xlu0 %v824
      %v826 = vpop.xlane.xlu0 %825
      %v827 = vmax.f32 %v790, %v791
      %828 = vmax.xlane.f32.xlu0 %v827
      %v829 = vpop.xlane.xlu0 %828
      %v830 = vmax.f32 %v792, %v793
      %831 = vmax.xlane.f32.xlu0 %v830
      %v832 = vpop.xlane.xlu0 %831
      %v833 = vmax.f32 %v794, %v795
      %834 = vmax.xlane.f32.xlu0 %v833
      %v835 = vpop.xlane.xlu0 %834
      %v836 = vmax.f32 %v796, %v797
      %837 = vmax.xlane.f32.xlu0 %v836
      %v838 = vpop.xlane.xlu0 %837
      %v839 = vmax.f32 %v798, %v799
      %840 = vmax.xlane.f32.xlu0 %v839
      %v841 = vpop.xlane.xlu0 %840
      %v842 = vmax.f32 %v800, %v801
      %843 = vmax.xlane.f32.xlu0 %v842
      %v844 = vpop.xlane.xlu0 %843
      %v845 = vmax.f32 %v802, %v803
      %846 = vmax.xlane.f32.xlu0 %v845
      %v847 = vpop.xlane.xlu0 %846
      %v848 = vmax.f32 %v804, %v805
      %849 = vmax.xlane.f32.xlu0 %v848
      %v850 = vpop.xlane.xlu0 %849
      %v851 = vmax.f32 %v806, %v807
      %852 = vmax.xlane.f32.xlu0 %v851
      %v853 = vpop.xlane.xlu0 %852
      %v854 = vmax.f32 %v808, %v809
      %855 = vmax.xlane.f32.xlu0 %v854
      %v856 = vpop.xlane.xlu0 %855
      %v857 = vmax.f32 %v810, %v811
      %858 = vmax.xlane.f32.xlu0 %v857
      %v859 = vpop.xlane.xlu0 %858
      %v860 = vadd.f32 %v780, %v781
      %861 = vadd.xlane.f32.xlu0 %v860
      %v862 = vpop.xlane.xlu0 %861
      %v863 = vadd.f32 %v782, %v783
      %864 = vadd.xlane.f32.xlu0 %v863
      %v865 = vpop.xlane.xlu0 %864
      %v866 = vadd.f32 %v784, %v785
      %867 = vadd.xlane.f32.xlu0 %v866
      %v868 = vpop.xlane.xlu0 %867
      %v869 = vadd.f32 %v786, %v787
      %870 = vadd.xlane.f32.xlu0 %v869
      %v871 = vpop.xlane.xlu0 %870
      %v872 = vadd.f32 %v788, %v789
      %873 = vadd.xlane.f32.xlu0 %v872
      %v874 = vpop.xlane.xlu0 %873
      %v875 = vadd.f32 %v790, %v791
      %876 = vadd.xlane.f32.xlu0 %v875
      %v877 = vpop.xlane.xlu0 %876
      %v878 = vadd.f32 %v792, %v793
      %879 = vadd.xlane.f32.xlu0 %v878
      %v880 = vpop.xlane.xlu0 %879
      %v881 = vadd.f32 %v794, %v795
      %882 = vadd.xlane.f32.xlu0 %v881
      %v883 = vpop.xlane.xlu0 %882
      %v884 = vadd.f32 %v796, %v797
      %885 = vadd.xlane.f32.xlu0 %v884
      %v886 = vpop.xlane.xlu0 %885
      %v887 = vadd.f32 %v798, %v799
      %888 = vadd.xlane.f32.xlu0 %v887
      %v889 = vpop.xlane.xlu0 %888
      %v890 = vadd.f32 %v800, %v801
      %891 = vadd.xlane.f32.xlu0 %v890
      %v892 = vpop.xlane.xlu0 %891
      %v893 = vadd.f32 %v802, %v803
      %894 = vadd.xlane.f32.xlu0 %v893
      %v895 = vpop.xlane.xlu0 %894
      %v896 = vadd.f32 %v804, %v805
      %897 = vadd.xlane.f32.xlu0 %v896
      %v898 = vpop.xlane.xlu0 %897
      %v899 = vadd.f32 %v806, %v807
      %900 = vadd.xlane.f32.xlu0 %v899
      %v901 = vpop.xlane.xlu0 %900
      %v902 = vadd.f32 %v808, %v809
      %903 = vadd.xlane.f32.xlu0 %v902
      %v904 = vpop.xlane.xlu0 %903
      %v905 = vadd.f32 %v810, %v811
      %906 = vadd.xlane.f32.xlu0 %v905
      %v907 = vpop.xlane.xlu0 %906
      %v908 = vmul.f32 %v862, 0.00390625
      %v909 = vmul.f32 %v865, 0.00390625
      %v910 = vmul.f32 %v868, 0.00390625
      %v911 = vmul.f32 %v871, 0.00390625
      %v912 = vmul.f32 %v874, 0.00390625
      %v913 = vmul.f32 %v877, 0.00390625
      %v914 = vmul.f32 %v880, 0.00390625
      %v915 = vmul.f32 %v883, 0.00390625
      %v916 = vmul.f32 %v886, 0.00390625
      %v917 = vmul.f32 %v889, 0.00390625
      %v918 = vmul.f32 %v892, 0.00390625
      %v919 = vmul.f32 %v895, 0.00390625
      %v920 = vmul.f32 %v898, 0.00390625
      %v921 = vmul.f32 %v901, 0.00390625
      %v922 = vmul.f32 %v904, 0.00390625
      %v923 = vmul.f32 %v907, 0.00390625
      %v924 = vld [vmem:[%s3] sm:$0xf]
      %v925 = vld [vmem:[%s3 + $0x4] sm:$0xf]
      %v926 = vld [vmem:[%s3 + $0x8] sm:$0xf]
      %v927 = vld [vmem:[%s3 + $0xc] sm:$0xf]
      %v928 = vld [vmem:[%s3 + $0x10] sm:$0xf]
      %v929 = vld [vmem:[%s3 + $0x14] sm:$0xf]
      %v930 = vld [vmem:[%s3 + $0x18] sm:$0xf]
      %v931 = vld [vmem:[%s3 + $0x1c] sm:$0xf]
      %v932 = vld [vmem:[%s3 + $0x20] sm:$0xf]
      %v933 = vld [vmem:[%s3 + $0x24] sm:$0xf]
      %v934 = vld [vmem:[%s3 + $0x28] sm:$0xf]
      %v935 = vld [vmem:[%s3 + $0x2c] sm:$0xf]
      %v936 = vld [vmem:[%s3 + $0x30] sm:$0xf]
      %v937 = vld [vmem:[%s3 + $0x34] sm:$0xf]
      %v938 = vld [vmem:[%s3 + $0x38] sm:$0xf]
      %v939 = vld [vmem:[%s3 + $0x3c] sm:$0xf]
      %v940 = vpack.c.bf16 %v817, %v814
      %v941 = vpack.c.bf16 %v823, %v820
      %v942 = vpack.c.bf16 %v829, %v826
      %v943 = vpack.c.bf16 %v835, %v832
      %v944 = vpack.c.bf16 %v841, %v838
      %v945 = vpack.c.bf16 %v847, %v844
      %v946 = vpack.c.bf16 %v853, %v850
      %v947 = vpack.c.bf16 %v859, %v856
      %v948 = vld [vmem:[%s4] sm:$0xf]
      %v949 = vld [vmem:[%s4 + $0x4] sm:$0xf]
      %v950 = vld [vmem:[%s4 + $0x8] sm:$0xf]
      %v951 = vld [vmem:[%s4 + $0xc] sm:$0xf]
      %v952 = vld [vmem:[%s4 + $0x10] sm:$0xf]
      %v953 = vld [vmem:[%s4 + $0x14] sm:$0xf]
      %v954 = vld [vmem:[%s4 + $0x18] sm:$0xf]
      %v955 = vld [vmem:[%s4 + $0x1c] sm:$0xf]
      %v956 = vld [vmem:[%s4 + $0x20] sm:$0xf]
      %v957 = vld [vmem:[%s4 + $0x24] sm:$0xf]
      %v958 = vld [vmem:[%s4 + $0x28] sm:$0xf]
      %v959 = vld [vmem:[%s4 + $0x2c] sm:$0xf]
      %v960 = vld [vmem:[%s4 + $0x30] sm:$0xf]
      %v961 = vld [vmem:[%s4 + $0x34] sm:$0xf]
      %v962 = vld [vmem:[%s4 + $0x38] sm:$0xf]
      %v963 = vld [vmem:[%s4 + $0x3c] sm:$0xf]
      %v964 = vpack.c.bf16 %v909, %v908
      %v965 = vpack.c.bf16 %v911, %v910
      %v966 = vpack.c.bf16 %v913, %v912
      %v967 = vpack.c.bf16 %v915, %v914
      %v968 = vpack.c.bf16 %v917, %v916
      %v969 = vpack.c.bf16 %v919, %v918
      %v970 = vpack.c.bf16 %v921, %v920
      %v971 = vpack.c.bf16 %v923, %v922
      %v988 = vunpack.c.l.b16 %v948
      %v989 = vunpack.c.l.b16 %v949
      %v990 = vunpack.c.l.b16 %v950
      %v991 = vunpack.c.l.b16 %v951
      %v992 = vunpack.c.l.b16 %v952
      %v993 = vunpack.c.l.b16 %v953
      %v994 = vunpack.c.l.b16 %v954
      %v995 = vunpack.c.l.b16 %v955
      %v996 = vunpack.c.l.b16 %v956
      %v997 = vunpack.c.l.b16 %v957
      %v998 = vunpack.c.l.b16 %v958
      %v999 = vunpack.c.l.b16 %v959
      %v1000 = vunpack.c.l.b16 %v960
      %v1001 = vunpack.c.l.b16 %v961
      %v1002 = vunpack.c.l.b16 %v962
      %v1003 = vunpack.c.l.b16 %v963
      %v1004 = vpack.c.b16 %v989, %v988
      %v1005 = vpack.c.b16 %v991, %v990
      %v1006 = vpack.c.b16 %v993, %v992
      %v1007 = vpack.c.b16 %v995, %v994
      %v1008 = vpack.c.b16 %v997, %v996
      %v1009 = vpack.c.b16 %v999, %v998
      %v1010 = vpack.c.b16 %v1001, %v1000
      %v1011 = vpack.c.b16 %v1003, %v1002
      %1020 = vmatprep.subr.bf16.mxu0 0
      %1021 = vmatpush1.bf16.msra.mxu0 %v964
      %1022 = vmatprep.subr.bf16.mxu0 0
      %1023 = vmatpush1.bf16.msra.mxu0 %v965
      %1024 = vmatprep.subr.bf16.mxu0 0
      %1025 = vmatpush1.bf16.msra.mxu0 %v966
      %1026 = vmatprep.subr.bf16.mxu0 0
      %1027 = vmatpush1.bf16.msra.mxu0 %v967
      %1028 = vmatprep.subr.bf16.mxu0 0
      %1029 = vmatpush1.bf16.msra.mxu0 %v968
      %1030 = vmatprep.subr.bf16.mxu0 0
      %1031 = vmatpush1.bf16.msra.mxu0 %v969
      %1032 = vmatprep.subr.bf16.mxu0 0
      %1033 = vmatpush1.bf16.msra.mxu0 %v970
      %1034 = vmatprep.subr.bf16.mxu0 0
      %1035 = vmatpush1.bf16.msra.mxu0 %v971
      %1036 = vmatprep.subr.bf16.mxu0 0
      %1037 = vmatpush1.bf16.msra.mxu0 0
      %1038 = vmatprep.subr.bf16.mxu0 0
      %1039 = vmatpush1.bf16.msra.mxu0 0
      %1040 = vmatprep.subr.bf16.mxu0 0
      %1041 = vmatpush1.bf16.msra.mxu0 0
      %1042 = vmatprep.subr.bf16.mxu0 0
      %1043 = vmatpush1.bf16.msra.mxu0 0
      %1044 = vmatprep.subr.bf16.mxu0 0
      %1045 = vmatpush1.bf16.msra.mxu0 0
      %1046 = vmatprep.subr.bf16.mxu0 0
      %1047 = vmatpush1.bf16.msra.mxu0 0
      %1048 = vmatprep.subr.bf16.mxu0 0
      %1049 = vmatpush1.bf16.msra.mxu0 0
      %1050 = vmatprep.subr.bf16.mxu0 0
      %1051 = vmatpush1.bf16.msra.mxu0 0
      %1052 = vmatprep.mubr.bf16.mxu0 0
      %1053 = vmatmul.mubr.bf16.gmra.mrb[0].mxu0 %v1004
      %v1054 = vpop.f32.mrb[0].mxu0
      %v1055 = vadd.f32 0.0, %v1054
      %v1056 = vpop.f32.mrb[0].mxu0
      %v1057 = vpop.f32.mrb[0].mxu0
      %v1058 = vadd.f32 0.0, %v1057
      %v1059 = vpop.f32.mrb[0].mxu0
      %1060 = vmatprep.mubr.bf16.mxu0 0
      %1061 = vmatmul.mubr.bf16.gmra.mrb[0].mxu0 %v1005
      %v1062 = vpop.f32.mrb[0].mxu0
      %v1063 = vadd.f32 0.0, %v1062
      %v1064 = vpop.f32.mrb[0].mxu0
      %v1065 = vpop.f32.mrb[0].mxu0
      %v1066 = vadd.f32 0.0, %v1065
      %v1067 = vpop.f32.mrb[0].mxu0
      %1068 = vmatprep.mubr.bf16.mxu0 0
      %1069 = vmatmul.mubr.bf16.gmra.mrb[0].mxu0 %v1006
      %v1070 = vpop.f32.mrb[0].mxu0
      %v1071 = vadd.f32 0.0, %v1070
      %v1072 = vpop.f32.mrb[0].mxu0
      %v1073 = vpop.f32.mrb[0].mxu0
      %v1074 = vadd.f32 0.0, %v1073
      %v1075 = vpop.f32.mrb[0].mxu0
      %1076 = vmatprep.mubr.bf16.mxu0 0
      %1077 = vmatmul.mubr.bf16.gmra.mrb[0].mxu0 %v1007
      %v1078 = vpop.f32.mrb[0].mxu0
      %v1079 = vadd.f32 0.0, %v1078
      %v1080 = vpop.f32.mrb[0].mxu0
      %v1081 = vpop.f32.mrb[0].mxu0
      %v1082 = vadd.f32 0.0, %v1081
      %v1083 = vpop.f32.mrb[0].mxu0
      %1084 = vmatprep.mubr.bf16.mxu0 0
      %1085 = vmatmul.mubr.bf16.gmra.mrb[0].mxu0 %v1008
      %v1086 = vpop.f32.mrb[0].mxu0
      %v1087 = vadd.f32 0.0, %v1086
      %v1088 = vpop.f32.mrb[0].mxu0
      %v1089 = vpop.f32.mrb[0].mxu0
      %v1090 = vadd.f32 0.0, %v1089
      %v1091 = vpop.f32.mrb[0].mxu0
      %1092 = vmatprep.mubr.bf16.mxu0 0
      %1093 = vmatmul.mubr.bf16.gmra.mrb[0].mxu0 %v1009
      %v1094 = vpop.f32.mrb[0].mxu0
      %v1095 = vadd.f32 0.0, %v1094
      %v1096 = vpop.f32.mrb[0].mxu0
      %v1097 = vpop.f32.mrb[0].mxu0
      %v1098 = vadd.f32 0.0, %v1097
      %v1099 = vpop.f32.mrb[0].mxu0
      %1100 = vmatprep.mubr.bf16.mxu0 0
      %1101 = vmatmul.mubr.bf16.gmra.mrb[0].mxu0 %v1010
      %v1102 = vpop.f32.mrb[0].mxu0
      %v1103 = vadd.f32 0.0, %v1102
      %v1104 = vpop.f32.mrb[0].mxu0
      %v1105 = vpop.f32.mrb[0].mxu0
      %v1106 = vadd.f32 0.0, %v1105
      %v1107 = vpop.f32.mrb[0].mxu0
      %1108 = vmatprep.mubr.bf16.mxu0 0
      %1109 = vmatmul.mubr.bf16.gmra.mrb[0].mxu0 %v1011
      %v1110 = vpop.f32.mrb[0].mxu0
      %v1111 = vadd.f32 0.0, %v1110
      %v1112 = vpop.f32.mrb[0].mxu0
      %v1113 = vpop.f32.mrb[0].mxu0
      %v1114 = vadd.f32 0.0, %v1113
      %v1115 = vpop.f32.mrb[0].mxu0
      %1116 = vdwg.mxu0
      %v1133 = vunpack.c.l.b16 %v924
      %v1134 = vunpack.c.l.b16 %v925
      %v1135 = vunpack.c.l.b16 %v926
      %v1136 = vunpack.c.l.b16 %v927
      %v1137 = vunpack.c.l.b16 %v928
      %v1138 = vunpack.c.l.b16 %v929
      %v1139 = vunpack.c.l.b16 %v930
      %v1140 = vunpack.c.l.b16 %v931
      %v1141 = vunpack.c.l.b16 %v932
      %v1142 = vunpack.c.l.b16 %v933
      %v1143 = vunpack.c.l.b16 %v934
      %v1144 = vunpack.c.l.b16 %v935
      %v1145 = vunpack.c.l.b16 %v936
      %v1146 = vunpack.c.l.b16 %v937
      %v1147 = vunpack.c.l.b16 %v938
      %v1148 = vunpack.c.l.b16 %v939
      %v1149 = vpack.c.b16 %v1134, %v1133
      %v1150 = vpack.c.b16 %v1136, %v1135
      %v1151 = vpack.c.b16 %v1138, %v1137
      %v1152 = vpack.c.b16 %v1140, %v1139
      %v1153 = vpack.c.b16 %v1142, %v1141
      %v1154 = vpack.c.b16 %v1144, %v1143
      %v1155 = vpack.c.b16 %v1146, %v1145
      %v1156 = vpack.c.b16 %v1148, %v1147
      %1165 = vmatprep.subr.bf16.mxu0 0
      %1166 = vmatpush1.bf16.msra.mxu0 %v940
      %1167 = vmatprep.subr.bf16.mxu0 0
      %1168 = vmatpush1.bf16.msra.mxu0 %v941
      %1169 = vmatprep.subr.bf16.mxu0 0
      %1170 = vmatpush1.bf16.msra.mxu0 %v942
      %1171 = vmatprep.subr.bf16.mxu0 0
      %1172 = vmatpush1.bf16.msra.mxu0 %v943
      %1173 = vmatprep.subr.bf16.mxu0 0
      %1174 = vmatpush1.bf16.msra.mxu0 %v944
      %1175 = vmatprep.subr.bf16.mxu0 0
      %1176 = vmatpush1.bf16.msra.mxu0 %v945
      %1177 = vmatprep.subr.bf16.mxu0 0
      %1178 = vmatpush1.bf16.msra.mxu0 %v946
      %1179 = vmatprep.subr.bf16.mxu0 0
      %1180 = vmatpush1.bf16.msra.mxu0 %v947
      %1181 = vmatprep.subr.bf16.mxu0 0
      %1182 = vmatpush1.bf16.msra.mxu0 0
      %1183 = vmatprep.subr.bf16.mxu0 0
      %1184 = vmatpush1.bf16.msra.mxu0 0
      %1185 = vmatprep.subr.bf16.mxu0 0
      %1186 = vmatpush1.bf16.msra.mxu0 0
      %1187 = vmatprep.subr.bf16.mxu0 0
      %1188 = vmatpush1.bf16.msra.mxu0 0
      %1189 = vmatprep.subr.bf16.mxu0 0
      %1190 = vmatpush1.bf16.msra.mxu0 0
      %1191 = vmatprep.subr.bf16.mxu0 0
      %1192 = vmatpush1.bf16.msra.mxu0 0
      %1193 = vmatprep.subr.bf16.mxu0 0
      %1194 = vmatpush1.bf16.msra.mxu0 0
      %1195 = vmatprep.subr.bf16.mxu0 0
      %1196 = vmatpush1.bf16.msra.mxu0 0
      %1197 = vmatprep.mubr.bf16.mxu0 0
      %1198 = vmatmul.mubr.bf16.gmra.mrb[0].mxu0 %v1149
      %v1199 = vpop.f32.mrb[0].mxu0
      %v1200 = vadd.f32 %v1055, %v1199
      %v1201 = vpop.f32.mrb[0].mxu0
      %v1202 = vpop.f32.mrb[0].mxu0
      %v1203 = vadd.f32 %v1058, %v1202
      %v1204 = vpop.f32.mrb[0].mxu0
      %1205 = vmatprep.mubr.bf16.mxu0 0
      %1206 = vmatmul.mubr.bf16.gmra.mrb[0].mxu0 %v1150
      %v1207 = vpop.f32.mrb[0].mxu0
      %v1208 = vadd.f32 %v1063, %v1207
      %v1209 = vpop.f32.mrb[0].mxu0
      %v1210 = vpop.f32.mrb[0].mxu0
      %v1211 = vadd.f32 %v1066, %v1210
      %v1212 = vpop.f32.mrb[0].mxu0
      %1213 = vmatprep.mubr.bf16.mxu0 0
      %1214 = vmatmul.mubr.bf16.gmra.mrb[0].mxu0 %v1151
      %v1215 = vpop.f32.mrb[0].mxu0
      %v1216 = vadd.f32 %v1071, %v1215
      %v1217 = vpop.f32.mrb[0].mxu0
      %v1218 = vpop.f32.mrb[0].mxu0
      %v1219 = vadd.f32 %v1074, %v1218
      %v1220 = vpop.f32.mrb[0].mxu0
      %1221 = vmatprep.mubr.bf16.mxu0 0
      %1222 = vmatmul.mubr.bf16.gmra.mrb[0].mxu0 %v1152
      %v1223 = vpop.f32.mrb[0].mxu0
      %v1224 = vadd.f32 %v1079, %v1223
      %v1225 = vpop.f32.mrb[0].mxu0
      %v1226 = vpop.f32.mrb[0].mxu0
      %v1227 = vadd.f32 %v1082, %v1226
      %v1228 = vpop.f32.mrb[0].mxu0
      %1229 = vmatprep.mubr.bf16.mxu0 0
      %1230 = vmatmul.mubr.bf16.gmra.mrb[0].mxu0 %v1153
      %v1231 = vpop.f32.mrb[0].mxu0
      %v1232 = vadd.f32 %v1087, %v1231
      %v1233 = vpop.f32.mrb[0].mxu0
      %v1234 = vpop.f32.mrb[0].mxu0
      %v1235 = vadd.f32 %v1090, %v1234
      %v1236 = vpop.f32.mrb[0].mxu0
      %1237 = vmatprep.mubr.bf16.mxu0 0
      %1238 = vmatmul.mubr.bf16.gmra.mrb[0].mxu0 %v1154
      %v1239 = vpop.f32.mrb[0].mxu0
      %v1240 = vadd.f32 %v1095, %v1239
      %v1241 = vpop.f32.mrb[0].mxu0
      %v1242 = vpop.f32.mrb[0].mxu0
      %v1243 = vadd.f32 %v1098, %v1242
      %v1244 = vpop.f32.mrb[0].mxu0
      %1245 = vmatprep.mubr.bf16.mxu0 0
      %1246 = vmatmul.mubr.bf16.gmra.mrb[0].mxu0 %v1155
      %v1247 = vpop.f32.mrb[0].mxu0
      %v1248 = vadd.f32 %v1103, %v1247
      %v1249 = vpop.f32.mrb[0].mxu0
      %v1250 = vpop.f32.mrb[0].mxu0
      %v1251 = vadd.f32 %v1106, %v1250
      %v1252 = vpop.f32.mrb[0].mxu0
      %1253 = vmatprep.mubr.bf16.mxu0 0
      %1254 = vmatmul.mubr.bf16.gmra.mrb[0].mxu0 %v1156
      %v1255 = vpop.f32.mrb[0].mxu0
      %v1256 = vadd.f32 %v1111, %v1255
      %v1257 = vpop.f32.mrb[0].mxu0
      %v1258 = vpop.f32.mrb[0].mxu0
      %v1259 = vadd.f32 %v1114, %v1258
      %v1260 = vpop.f32.mrb[0].mxu0
      %1261 = vdwg.mxu0
      %v1262 = vld [vmem:[%s5] sm:$0xff]
      %v1263 = vld [vmem:[%s5 + $0x8] sm:$0xff]
      %v1264 = vld [vmem:[%s5 + $0x10] sm:$0xff]
      %v1265 = vld [vmem:[%s5 + $0x18] sm:$0xff]
      %v1266 = vld [vmem:[%s5 + $0x20] sm:$0xff]
      %v1267 = vld [vmem:[%s5 + $0x28] sm:$0xff]
      %v1268 = vld [vmem:[%s5 + $0x30] sm:$0xff]
      %v1269 = vld [vmem:[%s5 + $0x38] sm:$0xff]
      %v1270 = vld [vmem:[%s5 + $0x40] sm:$0xff]
      %v1271 = vld [vmem:[%s5 + $0x48] sm:$0xff]
      %v1272 = vld [vmem:[%s5 + $0x50] sm:$0xff]
      %v1273 = vld [vmem:[%s5 + $0x58] sm:$0xff]
      %v1274 = vld [vmem:[%s5 + $0x60] sm:$0xff]
      %v1275 = vld [vmem:[%s5 + $0x68] sm:$0xff]
      %v1276 = vld [vmem:[%s5 + $0x70] sm:$0xff]
      %v1277 = vld [vmem:[%s5 + $0x78] sm:$0xff]
      %v1278 = vadd.f32 %v1200, %v1262
      %v1279 = vadd.f32 %v1203, %v1263
      %v1280 = vadd.f32 %v1208, %v1264
      %v1281 = vadd.f32 %v1211, %v1265
      %v1282 = vadd.f32 %v1216, %v1266
      %v1283 = vadd.f32 %v1219, %v1267
      %v1284 = vadd.f32 %v1224, %v1268
      %v1285 = vadd.f32 %v1227, %v1269
      %v1286 = vadd.f32 %v1232, %v1270
      %v1287 = vadd.f32 %v1235, %v1271
      %v1288 = vadd.f32 %v1240, %v1272
      %v1289 = vadd.f32 %v1243, %v1273
      %v1290 = vadd.f32 %v1248, %v1274
      %v1291 = vadd.f32 %v1251, %v1275
      %v1292 = vadd.f32 %v1256, %v1276
      %v1293 = vadd.f32 %v1259, %v1277
      %v1294 = vmax.f32 %v1278, 0.0
      %v1295 = vmax.f32 %v1279, 0.0
      %v1296 = vmax.f32 %v1280, 0.0
      %v1297 = vmax.f32 %v1281, 0.0
      %v1298 = vmax.f32 %v1282, 0.0
      %v1299 = vmax.f32 %v1283, 0.0
      %v1300 = vmax.f32 %v1284, 0.0
      %v1301 = vmax.f32 %v1285, 0.0
      %v1302 = vmax.f32 %v1286, 0.0
      %v1303 = vmax.f32 %v1287, 0.0
      %v1304 = vmax.f32 %v1288, 0.0
      %v1305 = vmax.f32 %v1289, 0.0
      %v1306 = vmax.f32 %v1290, 0.0
      %v1307 = vmax.f32 %v1291, 0.0
      %v1308 = vmax.f32 %v1292, 0.0
      %v1309 = vmax.f32 %v1293, 0.0
      %v1310 = vld [vmem:[%s6] sm:$0xf]
      %v1311 = vld [vmem:[%s6 + $0x4] sm:$0xf]
      %v1312 = vld [vmem:[%s6 + $0x8] sm:$0xf]
      %v1313 = vld [vmem:[%s6 + $0xc] sm:$0xf]
      %v1314 = vld [vmem:[%s6 + $0x10] sm:$0xf]
      %v1315 = vld [vmem:[%s6 + $0x14] sm:$0xf]
      %v1316 = vld [vmem:[%s6 + $0x18] sm:$0xf]
      %v1317 = vld [vmem:[%s6 + $0x1c] sm:$0xf]
      %v1318 = vld [vmem:[%s6 + $0x20] sm:$0xf]
      %v1319 = vld [vmem:[%s6 + $0x24] sm:$0xf]
      %v1320 = vld [vmem:[%s6 + $0x28] sm:$0xf]
      %v1321 = vld [vmem:[%s6 + $0x2c] sm:$0xf]
      %v1322 = vld [vmem:[%s6 + $0x30] sm:$0xf]
      %v1323 = vld [vmem:[%s6 + $0x34] sm:$0xf]
      %v1324 = vld [vmem:[%s6 + $0x38] sm:$0xf]
      %v1325 = vld [vmem:[%s6 + $0x3c] sm:$0xf]
      %v1326 = vpack.c.bf16 %v1295, %v1294
      %v1327 = vpack.c.bf16 %v1297, %v1296
      %v1328 = vpack.c.bf16 %v1299, %v1298
      %v1329 = vpack.c.bf16 %v1301, %v1300
      %v1330 = vpack.c.bf16 %v1303, %v1302
      %v1331 = vpack.c.bf16 %v1305, %v1304
      %v1332 = vpack.c.bf16 %v1307, %v1306
      %v1333 = vpack.c.bf16 %v1309, %v1308
      %v1334 = vld [vmem:[%s7] sm:$0xff]
      %v1335 = vld [vmem:[%s7 + $0x8] sm:$0xff]
      %v1336 = vld [vmem:[%s7 + $0x10] sm:$0xff]
      %v1337 = vld [vmem:[%s7 + $0x18] sm:$0xff]
      %v1338 = vld [vmem:[%s7 + $0x20] sm:$0xff]
      %v1339 = vld [vmem:[%s7 + $0x28] sm:$0xff]
      %v1340 = vld [vmem:[%s7 + $0x30] sm:$0xff]
      %v1341 = vld [vmem:[%s7 + $0x38] sm:$0xff]
      %v1342 = vld [vmem:[%s7 + $0x40] sm:$0xff]
      %v1343 = vld [vmem:[%s7 + $0x48] sm:$0xff]
      %v1344 = vld [vmem:[%s7 + $0x50] sm:$0xff]
      %v1345 = vld [vmem:[%s7 + $0x58] sm:$0xff]
      %v1346 = vld [vmem:[%s7 + $0x60] sm:$0xff]
      %v1347 = vld [vmem:[%s7 + $0x68] sm:$0xff]
      %v1348 = vld [vmem:[%s7 + $0x70] sm:$0xff]
      %v1349 = vld [vmem:[%s7 + $0x78] sm:$0xff]
      %v1366 = vunpack.c.l.b16 %v1310
      %v1367 = vunpack.c.l.b16 %v1311
      %v1368 = vunpack.c.l.b16 %v1312
      %v1369 = vunpack.c.l.b16 %v1313
      %v1370 = vunpack.c.l.b16 %v1314
      %v1371 = vunpack.c.l.b16 %v1315
      %v1372 = vunpack.c.l.b16 %v1316
      %v1373 = vunpack.c.l.b16 %v1317
      %v1374 = vunpack.c.l.b16 %v1318
      %v1375 = vunpack.c.l.b16 %v1319
      %v1376 = vunpack.c.l.b16 %v1320
      %v1377 = vunpack.c.l.b16 %v1321
      %v1378 = vunpack.c.l.b16 %v1322
      %v1379 = vunpack.c.l.b16 %v1323
      %v1380 = vunpack.c.l.b16 %v1324
      %v1381 = vunpack.c.l.b16 %v1325
      %v1382 = vpack.c.b16 %v1367, %v1366
      %v1383 = vpack.c.b16 %v1369, %v1368
      %v1384 = vpack.c.b16 %v1371, %v1370
      %v1385 = vpack.c.b16 %v1373, %v1372
      %v1386 = vpack.c.b16 %v1375, %v1374
      %v1387 = vpack.c.b16 %v1377, %v1376
      %v1388 = vpack.c.b16 %v1379, %v1378
      %v1389 = vpack.c.b16 %v1381, %v1380
      %1398 = vmatprep.subr.bf16.mxu0 0
      %1399 = vmatpush1.bf16.msra.mxu0 %v1326
      %1400 = vmatprep.subr.bf16.mxu0 0
      %1401 = vmatpush1.bf16.msra.mxu0 %v1327
      %1402 = vmatprep.subr.bf16.mxu0 0
      %1403 = vmatpush1.bf16.msra.mxu0 %v1328
      %1404 = vmatprep.subr.bf16.mxu0 0
      %1405 = vmatpush1.bf16.msra.mxu0 %v1329
      %1406 = vmatprep.subr.bf16.mxu0 0
      %1407 = vmatpush1.bf16.msra.mxu0 %v1330
      %1408 = vmatprep.subr.bf16.mxu0 0
      %1409 = vmatpush1.bf16.msra.mxu0 %v1331
      %1410 = vmatprep.subr.bf16.mxu0 0
      %1411 = vmatpush1.bf16.msra.mxu0 %v1332
      %1412 = vmatprep.subr.bf16.mxu0 0
      %1413 = vmatpush1.bf16.msra.mxu0 %v1333
      %1414 = vmatprep.subr.bf16.mxu0 0
      %1415 = vmatpush1.bf16.msra.mxu0 0
      %1416 = vmatprep.subr.bf16.mxu0 0
      %1417 = vmatpush1.bf16.msra.mxu0 0
      %1418 = vmatprep.subr.bf16.mxu0 0
      %1419 = vmatpush1.bf16.msra.mxu0 0
      %1420 = vmatprep.subr.bf16.mxu0 0
      %1421 = vmatpush1.bf16.msra.mxu0 0
      %1422 = vmatprep.subr.bf16.mxu0 0
      %1423 = vmatpush1.bf16.msra.mxu0 0
      %1424 = vmatprep.subr.bf16.mxu0 0
      %1425 = vmatpush1.bf16.msra.mxu0 0
      %1426 = vmatprep.subr.bf16.mxu0 0
      %1427 = vmatpush1.bf16.msra.mxu0 0
      %1428 = vmatprep.subr.bf16.mxu0 0
      %1429 = vmatpush1.bf16.msra.mxu0 0
      %1430 = vmatprep.mubr.bf16.mxu0 0
      %1431 = vmatmul.mubr.bf16.gmra.mrb[0].mxu0 %v1382
      %v1432 = vpop.f32.mrb[0].mxu0
      %v1433 = vadd.f32 %v1334, %v1432
      %v1434 = vpop.f32.mrb[0].mxu0
      %v1435 = vpop.f32.mrb[0].mxu0
      %v1436 = vadd.f32 %v1335, %v1435
      %v1437 = vpop.f32.mrb[0].mxu0
      %1438 = vmatprep.mubr.bf16.mxu0 0
      %1439 = vmatmul.mubr.bf16.gmra.mrb[0].mxu0 %v1383
      %v1440 = vpop.f32.mrb[0].mxu0
      %v1441 = vadd.f32 %v1336, %v1440
      %v1442 = vpop.f32.mrb[0].mxu0
      %v1443 = vpop.f32.mrb[0].mxu0
      %v1444 = vadd.f32 %v1337, %v1443
      %v1445 = vpop.f32.mrb[0].mxu0
      %1446 = vmatprep.mubr.bf16.mxu0 0
      %1447 = vmatmul.mubr.bf16.gmra.mrb[0].mxu0 %v1384
      %v1448 = vpop.f32.mrb[0].mxu0
      %v1449 = vadd.f32 %v1338, %v1448
      %v1450 = vpop.f32.mrb[0].mxu0
      %v1451 = vpop.f32.mrb[0].mxu0
      %v1452 = vadd.f32 %v1339, %v1451
      %v1453 = vpop.f32.mrb[0].mxu0
      %1454 = vmatprep.mubr.bf16.mxu0 0
      %1455 = vmatmul.mubr.bf16.gmra.mrb[0].mxu0 %v1385
      %v1456 = vpop.f32.mrb[0].mxu0
      %v1457 = vadd.f32 %v1340, %v1456
      %v1458 = vpop.f32.mrb[0].mxu0
      %v1459 = vpop.f32.mrb[0].mxu0
      %v1460 = vadd.f32 %v1341, %v1459
      %v1461 = vpop.f32.mrb[0].mxu0
      %1462 = vmatprep.mubr.bf16.mxu0 0
      %1463 = vmatmul.mubr.bf16.gmra.mrb[0].mxu0 %v1386
      %v1464 = vpop.f32.mrb[0].mxu0
      %v1465 = vadd.f32 %v1342, %v1464
      %v1466 = vpop.f32.mrb[0].mxu0
      %v1467 = vpop.f32.mrb[0].mxu0
      %v1468 = vadd.f32 %v1343, %v1467
      %v1469 = vpop.f32.mrb[0].mxu0
      %1470 = vmatprep.mubr.bf16.mxu0 0
      %1471 = vmatmul.mubr.bf16.gmra.mrb[0].mxu0 %v1387
      %v1472 = vpop.f32.mrb[0].mxu0
      %v1473 = vadd.f32 %v1344, %v1472
      %v1474 = vpop.f32.mrb[0].mxu0
      %v1475 = vpop.f32.mrb[0].mxu0
      %v1476 = vadd.f32 %v1345, %v1475
      %v1477 = vpop.f32.mrb[0].mxu0
      %1478 = vmatprep.mubr.bf16.mxu0 0
      %1479 = vmatmul.mubr.bf16.gmra.mrb[0].mxu0 %v1388
      %v1480 = vpop.f32.mrb[0].mxu0
      %v1481 = vadd.f32 %v1346, %v1480
      %v1482 = vpop.f32.mrb[0].mxu0
      %v1483 = vpop.f32.mrb[0].mxu0
      %v1484 = vadd.f32 %v1347, %v1483
      %v1485 = vpop.f32.mrb[0].mxu0
      %1486 = vmatprep.mubr.bf16.mxu0 0
      %1487 = vmatmul.mubr.bf16.gmra.mrb[0].mxu0 %v1389
      %v1488 = vpop.f32.mrb[0].mxu0
      %v1489 = vadd.f32 %v1348, %v1488
      %v1490 = vpop.f32.mrb[0].mxu0
      %v1491 = vpop.f32.mrb[0].mxu0
      %v1492 = vadd.f32 %v1349, %v1491
      %v1493 = vpop.f32.mrb[0].mxu0
      %1494 = vdwg.mxu0
      %1495 = vst.msk [vmem:[%s305] sm:$0xff] %vm411, %v1433
      %1496 = vst.msk [vmem:[%s305 + $0x8] sm:$0xff] %vm411, %v1436
      %1497 = vst.msk [vmem:[%s305 + $0x10] sm:$0xff] %vm411, %v1441
      %1498 = vst.msk [vmem:[%s305 + $0x18] sm:$0xff] %vm411, %v1444
      %1499 = vst.msk [vmem:[%s305 + $0x20] sm:$0xff] %vm411, %v1449
      %1500 = vst.msk [vmem:[%s305 + $0x28] sm:$0xff] %vm411, %v1452
      %1501 = vst.msk [vmem:[%s305 + $0x30] sm:$0xff] %vm411, %v1457
      %1502 = vst.msk [vmem:[%s305 + $0x38] sm:$0xff] %vm411, %v1460
      %1503 = vst.msk [vmem:[%s305 + $0x40] sm:$0xff] %vm411, %v1465
      %1504 = vst.msk [vmem:[%s305 + $0x48] sm:$0xff] %vm411, %v1468
      %1505 = vst.msk [vmem:[%s305 + $0x50] sm:$0xff] %vm411, %v1473
      %1506 = vst.msk [vmem:[%s305 + $0x58] sm:$0xff] %vm411, %v1476
      %1507 = vst.msk [vmem:[%s305 + $0x60] sm:$0xff] %vm411, %v1481
      %1508 = vst.msk [vmem:[%s305 + $0x68] sm:$0xff] %vm411, %v1484
      %1509 = vst.msk [vmem:[%s305 + $0x70] sm:$0xff] %vm411, %v1489
      %1510 = vst.msk [vmem:[%s305 + $0x78] sm:$0xff] %vm411, %v1492
      %p1511 = scmp.lt.s32.totalorder %s19, 1
      %s1512 = scalar_select %p1511, %s19, 1
      %s1513 = smul.addr %s1512, 16
      %s1514 = smul.addr %s1513, 8
      %s1515 = scalar_lea.vmem %s8, %s1514
      // Predicated region
      $region53: #{_lambda_.1} parent=51 // pred_check
        %p1516 = pneg %p210
      $region54: #{_lambda_.1} parent=51 // pred_check_branch
        %1518 = sbr.rel (%p1516) target = $region56
      $region55: #{_lambda_.1} parent=51 // pred_region
        _
      $region56: #{_lambda_.1} parent=51 // pred_fallthru
        _
    $region52: #{_lambda_.1} parent=5 // pred_fallthru
      _
    %p1519 = scmp.le.s32.totalorder 2, %s14
    // Predicated region
    $region57: #{_lambda_.1} parent=5 // pred_check
      %p1520 = pneg %p1519
    $region58: #{_lambda_.1} parent=5 // pred_check_branch
      %1522 = sbr.rel (%p1520) target = $region60
    $region59: #{_lambda_.1} parent=5 // pred_region
      %s1523 = ssub.s32 %s14, 2
      // Predicated region
      $region61: #{_lambda_.1} parent=59 // pred_check
        %p1524 = pneg %p216
      $region62: #{_lambda_.1} parent=59 // pred_check_branch
        %1526 = sbr.rel (%p1524) target = $region64
      $region63: #{_lambda_.1} parent=59 // pred_region
        %p1527 = scmp.lt.s32.totalorder %s20, 1
        %s1528 = scalar_select %p1527, %s20, 1
        %s1529 = smul.addr %s1528, 16
        %s1530 = smul.addr %s1529, 8
        %s1531 = scalar_lea.vmem %s8, %s1530
      $region64: #{_lambda_.1} parent=59 // pred_fallthru
        _
    $region60: #{_lambda_.1} parent=5 // pred_fallthru
      _
  $region6: #{_lambda_.1} parent=0 // loop_footer
    %s18 = sadd.s32 1, %s14
  $region7: #{_lambda_.1} parent=0 // loop_footer_branch
    %13 = sbr.rel target = $region3
  $region8: #{_lambda_.1} parent=0 // loop_exit
    _

</llo_original>
